<compile_context>
chip_gen: v7x
topology: tpu7x:2x2x1
jax: 0.10.0
libtpu: 0.0.40
codegen_flags: <defaults>
</compile_context>

<pallas_src>
import jax
import jax.numpy as jnp
from jax.experimental import pallas as pl
from jax.experimental.pallas import tpu as pltpu


# ----------------------------------------------------------------------------
# Kernel body: fused 3x3 conv (stride 1, pad=1) + bias + SiLU on one tile of
# TH output rows x TC output channels.
# ----------------------------------------------------------------------------
def _conv_body(xt, w_ref, b_ref, o_ref, unroll_taps):
    # xt    : (TH+2, Wp, Cin) bf16  halo'd window of the zero-padded NHWC input
    # w_ref : (9*Cin, TC)     bf16  fused 3x3 kernel, rows ordered (ky, kx, ci)
    # b_ref : (1, TC)         f32   fused bias
    # o_ref : (1, TH, W, TC)  bf16
    THp2, Wp, Cin = xt.shape
    TH = THp2 - 2
    W = Wp - 2
    TC = o_ref.shape[-1]

    if unroll_taps:
        # 9 accumulated K=Cin matmuls: no im2col materialization, no lane-axis
        # concat.  Each tap's lhs slice is live only during its own matmul, so
        # peak scratch is ~1 input tile + the f32 accumulator.
        acc = jnp.zeros((TH * W, TC), jnp.float32)
        for ky in range(3):
            for kx in range(3):
                lhs = xt[ky:ky + TH, kx:kx + W, :].reshape(TH * W, Cin)
                rhs = w_ref[pl.ds((3 * ky + kx) * Cin, Cin), :]
                acc = acc + jnp.dot(lhs, rhs, preferred_element_type=jnp.float32)
    else:
        # Small-Cin fallback (9*Cin < 128): one well-shaped matmul beats nine
        # K=Cin slivers; the 9x patch blow-up is tiny at this size.
        cols = [xt[ky:ky + TH, kx:kx + W, :] for ky in range(3) for kx in range(3)]
        patches = jnp.concatenate(cols, axis=-1).reshape(TH * W, 9 * Cin)
        acc = jnp.dot(patches, w_ref[...], preferred_element_type=jnp.float32)

    acc = acc + b_ref[...]                      # f32 bias add
    y = acc * jax.nn.sigmoid(acc)               # SiLU (sigmoid -> EUP slot)
    o_ref[...] = y.reshape(1, TH, W, TC).astype(o_ref.dtype)


def _make_kernel(merged_halo, unroll_taps):
    if merged_halo:
        def kernel(x_ref, halo_ref, w_ref, b_ref, o_ref):
            # concat along the (cheap) major axis only
            xt = jnp.concatenate([x_ref[0], halo_ref[0]], axis=0)
            _conv_body(xt, w_ref, b_ref, o_ref, unroll_taps)
    else:
        def kernel(x_ref, h1_ref, h2_ref, w_ref, b_ref, o_ref):
            xt = jnp.concatenate([x_ref[0], h1_ref[0], h2_ref[0]], axis=0)
            _conv_body(xt, w_ref, b_ref, o_ref, unroll_taps)
    return kernel


# ----------------------------------------------------------------------------
# Tile / VMEM sizing
# ----------------------------------------------------------------------------
def _vmem_budget_bytes():
    """Per-generation scoped-VMEM budget: ~3/4 of physical, capped at 100 MiB.
    v5e/v6e (128 MiB) -> ~96 MiB; v7x (64 MiB) -> 48 MiB."""
    cap = None
    try:
        info = pltpu.get_tpu_info()
        cap = int(getattr(info, "vmem_capacity_bytes", 0)) or None
    except Exception:
        cap = None
    if cap is None:
        return 48 * 1024 * 1024  # conservative fallback (safe on v7x)
    return max(32 * 1024 * 1024, min(cap * 3 // 4, 100 * 1024 * 1024))


def _estimate_vmem(TH, TC, Wp, Cin, small_cin):
    W = Wp - 2
    in_blk = TH * Wp * Cin * 2
    halo_blk = 2 * Wp * Cin * 2
    w_blk = 9 * Cin * TC * 2
    b_blk = TC * 4
    out_blk = TH * W * TC * 2
    pipelined = 2 * (in_blk + halo_blk + w_blk + b_blk + out_blk)  # double-buffered
    xt = (TH + 2) * Wp * Cin * 2
    acc = TH * W * TC * 4
    if small_cin:
        scratch = xt + 2 * TH * W * 9 * Cin * 2 + acc   # im2col patches (+ slop)
    else:
        scratch = xt + 2 * TH * W * Cin * 2 + acc       # one tap lhs (+ slop)
    return pipelined + scratch


def _choose_tiles(H, Wp, Cin, Cout, vmem_budget):
    """Pick (TH, TC). Large TC first (fewer full-input re-reads when Cout/TC>1),
    then the largest row tile that fits ~70% of the VMEM budget."""
    tc_cands = [c for c in (512, 384, 256, 128) if c <= Cout and Cout % c == 0]
    if not tc_cands:
        tc_cands = [Cout]
    th_cands = [t for t in (64, 32, 16, 8, 4, 2) if t <= H and H % t == 0]
    if not th_cands:
        th_cands = [H]
    small_cin = 9 * Cin < 128
    limit = int(vmem_budget * 0.7)
    for tc in tc_cands:
        for th in th_cands:
            if _estimate_vmem(th, tc, Wp, Cin, small_cin) <= limit:
                return th, tc
    return th_cands[-1], tc_cands[-1]


# ----------------------------------------------------------------------------
# pallas_call wrapper
# ----------------------------------------------------------------------------
def repconv_pallas(xp, w2d, b):
    """xp : (N, H+2, W+2, Cin) bf16 padded NHWC input.
    w2d: (9*Cin, Cout) bf16 im2col-flattened fused weights, row order (ky,kx,ci),
         with Cout already padded to a multiple of 128.
    b  : (1, Cout) f32 fused bias.
    Returns (N, H, W, Cout) bf16."""
    N, Hp, Wp, Cin = xp.shape
    H, W = Hp - 2, Wp - 2
    Cout = w2d.shape[-1]

    vmem_budget = _vmem_budget_bytes()
    TH, TC = _choose_tiles(H, Wp, Cin, Cout, vmem_budget)
    assert H % TH == 0 and Cout % TC == 0
    # Last two block dims must be (8,128)-divisible or cover the full dim.
    assert TC == Cout or TC % 128 == 0

    small_cin = 9 * Cin < 128
    merged_halo = (TH % 2 == 0)
    kernel = _make_kernel(merged_halo, unroll_taps=not small_cin)

    # Cout-tile outermost: the weight/bias tiles stay VMEM-resident across the
    # whole (n, h) sweep.  Every output block is written exactly once, so all
    # axes are "parallel" (megacore-safe on v7x).
    grid = (Cout // TC, N, H // TH)

    main_spec = pl.BlockSpec((1, TH, Wp, Cin), lambda co, n, h: (n, h, 0, 0))
    if merged_halo:
        # One (1,2,Wp,Cin) halo block: rows [(h+1)*TH, (h+1)*TH + 2) of the
        # padded input, addressed in units of 2 rows (TH is even).
        halo_specs = [
            pl.BlockSpec((1, 2, Wp, Cin),
                         lambda co, n, h: (n, (h + 1) * (TH // 2), 0, 0)),
        ]
        halo_args = (xp,)
    else:
        halo_specs = [
            pl.BlockSpec((1, 1, Wp, Cin), lambda co, n, h: (n, (h + 1) * TH, 0, 0)),
            pl.BlockSpec((1, 1, Wp, Cin), lambda co, n, h: (n, (h + 1) * TH + 1, 0, 0)),
        ]
        halo_args = (xp, xp)

    w_spec = pl.BlockSpec((9 * Cin, TC), lambda co, n, h: (0, co))
    b_spec = pl.BlockSpec((1, TC), lambda co, n, h: (0, co))
    out_spec = pl.BlockSpec((1, TH, W, TC), lambda co, n, h: (n, h, 0, co))

    n_passes = Cout // TC
    cost = pl.CostEstimate(
        flops=2 * N * H * W * 9 * Cin * Cout,
        transcendentals=N * H * W * Cout,
        bytes_accessed=(N * Hp * Wp * Cin * 2) * n_passes   # input re-read per Cout pass
                       + 9 * Cin * Cout * 2                 # weights
                       + Cout * 4                           # bias
                       + N * H * W * Cout * 2,              # bf16 output
    )

    return pl.pallas_call(
        kernel,
        out_shape=jax.ShapeDtypeStruct((N, H, W, Cout), jnp.bfloat16),
        grid=grid,
        in_specs=[main_spec] + halo_specs + [w_spec, b_spec],
        out_specs=out_spec,
        compiler_params=pltpu.CompilerParams(
            dimension_semantics=("parallel", "parallel", "parallel"),
            vmem_limit_bytes=vmem_budget,
        ),
        cost_estimate=cost,
    )(xp, *halo_args, w2d, b)


# ----------------------------------------------------------------------------
# Plain-JAX glue: BN folding / branch merging (RepConv equivalent kernel+bias)
# and layout transforms.
# ----------------------------------------------------------------------------
def fuse_conv_bn(kernel_oihw, gamma, beta, mean, var, eps=1e-3):
    std = jnp.sqrt(var + eps)
    t = (gamma / std).reshape(-1, 1, 1, 1)
    return kernel_oihw * t, beta - mean * gamma / std


def make_repconv_params(key, c1, c2, eps=1e-3):
    """Deterministic parameters for the three RepConv branches, fused into a
    single equivalent 3x3 kernel (OIHW) + bias.  eps=1e-3 matches the module."""
    ks = jax.random.split(key, 12)
    # 3x3 dense branch: Conv2d(c1, c2, 3, bias=False) + BN(c2)
    w3 = jax.random.normal(ks[0], (c2, c1, 3, 3), jnp.float32) * 0.1
    g3 = 1.0 + 0.1 * jax.random.normal(ks[1], (c2,), jnp.float32)
    b3 = 0.1 * jax.random.normal(ks[2], (c2,), jnp.float32)
    m3 = 0.1 * jax.random.normal(ks[3], (c2,), jnp.float32)
    v3 = jnp.abs(jax.random.normal(ks[4], (c2,), jnp.float32)) + 0.5
    # 1x1 branch: Conv2d(c1, c2, 1, bias=False) + BN(c2)
    w1 = jax.random.normal(ks[5], (c2, c1, 1, 1), jnp.float32) * 0.1
    g1 = 1.0 + 0.1 * jax.random.normal(ks[6], (c2,), jnp.float32)
    b1 = 0.1 * jax.random.normal(ks[7], (c2,), jnp.float32)
    m1 = 0.1 * jax.random.normal(ks[8], (c2,), jnp.float32)
    v1 = jnp.abs(jax.random.normal(ks[9], (c2,), jnp.float32)) + 0.5
    # identity branch: BN(c1)  (exists only when c1 == c2, stride 1)
    gi = 1.0 + 0.1 * jax.random.normal(ks[10], (c1,), jnp.float32)
    bi = 0.1 * jax.random.normal(ks[11], (c1,), jnp.float32)
    mi = 0.05 * jnp.ones((c1,), jnp.float32)
    vi = 0.9 * jnp.ones((c1,), jnp.float32)

    k3, bias3 = fuse_conv_bn(w3, g3, b3, m3, v3, eps)
    k1, bias1 = fuse_conv_bn(w1, g1, b1, m1, v1, eps)
    k1_pad = jnp.pad(k1, ((0, 0), (0, 0), (1, 1), (1, 1)))   # 1x1 -> 3x3 center
    assert c1 == c2
    id_kernel = jnp.zeros((c1, c1, 3, 3), jnp.float32)
    id_kernel = id_kernel.at[jnp.arange(c1), jnp.arange(c1), 1, 1].set(1.0)
    kid, biasid = fuse_conv_bn(id_kernel, gi, bi, mi, vi, eps)

    kernel = k3 + k1_pad + kid          # (c2, c1, 3, 3) OIHW
    bias = bias3 + bias1 + biasid       # (c2,)
    return kernel, bias


@jax.jit
def repconv_forward(x_nchw, kernel_oihw, bias):
    N, Cin, H, W = x_nchw.shape
    Cout = kernel_oihw.shape[0]
    # Pad Cout to a multiple of 128 so the output tile is lane-dense (unmasked
    # stores) and the MXU N dimension is full; zero columns cost nothing here.
    Cout_p = ((Cout + 127) // 128) * 128

    # NCHW -> NHWC + spatial pad by 1 (autopad(3)==1, stride 1) + cast to bf16
    # (bf16 MXU operands, f32 accumulation in-kernel); XLA fuses these passes.
    x = jnp.transpose(x_nchw, (0, 2, 3, 1))
    xp = jnp.pad(x, ((0, 0), (1, 1), (1, 1), (0, 0))).astype(jnp.bfloat16)

    # OIHW -> HWIO -> (9*Cin, Cout) im2col weight matrix, row order (ky, kx, ci)
    w2d = jnp.transpose(kernel_oihw, (2, 3, 1, 0)).reshape(9 * Cin, Cout)
    b = bias
    if Cout_p != Cout:
        w2d = jnp.pad(w2d, ((0, 0), (0, Cout_p - Cout)))
        b = jnp.pad(b, (0, Cout_p - Cout))
    w2d = w2d.astype(jnp.bfloat16)
    b = b.reshape(1, Cout_p).astype(jnp.float32)

    y_nhwc = repconv_pallas(xp, w2d, b)          # (N, H, W, Cout_p) bf16
    y_nhwc = y_nhwc[..., :Cout]
    # back to NCHW f32 (PyTorch convention)
    return jnp.transpose(y_nhwc, (0, 3, 1, 2)).astype(jnp.float32)


def reference_forward(x_nchw, kernel_oihw, bias):
    y = jax.lax.conv_general_dilated(
        x_nchw, kernel_oihw,
        window_strides=(1, 1), padding=((1, 1), (1, 1)),
        dimension_numbers=("NCHW", "OIHW", "NCHW"),
    ) + bias.reshape(1, -1, 1, 1)
    return y * jax.nn.sigmoid(y)


def _check(x, kernel, bias, name):
    out = repconv_forward(x, kernel, bias)
    jax.block_until_ready(out)
    ref = reference_forward(x, kernel, bias)
    assert out.shape == ref.shape
    # bf16 operands + bf16 output vs an f32 reference -> relative tolerance.
    err = float(jnp.max(jnp.abs(out - ref)))
    scale = 1.0 + float(jnp.max(jnp.abs(ref)))
    assert err / scale < 2e-2, f"{name}: mismatch vs reference conv (err={err})"


if __name__ == "__main__":
    key = jax.random.PRNGKey(0)
    kx1, kp1, kx2, kp2 = jax.random.split(key, 4)

    # Small shape matching the module spec (c1 == c2 == 4, stride 1, k=3, g=1):
    # exercises the padded-Cout + im2col (small-Cin) path.
    N, C, H, W = 2, 4, 16, 16
    x_small = jax.random.normal(kx1, (N, C, H, W), jnp.float32)
    k_small, b_small = make_repconv_params(kp1, C, C)
    _check(x_small, k_small, b_small, "small")

    # Lane-dense shape (Cin = Cout = 128): exercises the unrolled 9-matmul path
    # with a full MXU K/N dimension.
    N2, C2, H2, W2 = 1, 128, 16, 16
    x_big = jax.random.normal(kx2, (N2, C2, H2, W2), jnp.float32)
    k_big, b_big = make_repconv_params(kp2, C2, C2)
    _check(x_big, k_big, b_big, "lane_dense")

    print("KERNEL_OK")
</pallas_src>

<mosaic_0001>
module attributes {stable_mosaic.version = 11 : i64} {
  func.func @kernel(%arg0: i32, %arg1: i32, %arg2: i32, %arg3: memref<1x16x18x4xbf16, #tpu.memory_space<vmem>>, %arg4: memref<1x2x18x4xbf16, #tpu.memory_space<vmem>>, %arg5: memref<36x128xbf16, #tpu.memory_space<vmem>>, %arg6: memref<1x128xf32, #tpu.memory_space<vmem>>, %arg7: memref<1x16x16x128xbf16, #tpu.memory_space<vmem>>) attributes {dimension_semantics = [#tpu.dimension_semantics<parallel>, #tpu.dimension_semantics<parallel>, #tpu.dimension_semantics<parallel>], iteration_bounds = array<i64: 1, 2, 1>, scalar_prefetch = 0 : i64, scratch_operands = 0 : i64, tpu.core_type = #tpu.core_type<tc>, window_params = [{transform_indices = @transform_0, window_bounds = array<i64: 1, 16, 18, 4>}, {transform_indices = @transform_1, window_bounds = array<i64: 1, 2, 18, 4>}, {transform_indices = @transform_2, window_bounds = array<i64: 36, 128>}, {transform_indices = @transform_3, window_bounds = array<i64: 1, 128>}, {transform_indices = @transform_4, window_bounds = array<i64: 1, 16, 16, 128>}]} {
    %c0 = arith.constant 0 : index
    %c0_0 = arith.constant 0 : index
    %c0_1 = arith.constant 0 : index
    %c0_2 = arith.constant 0 : index
    %0 = vector.load %arg3[%c0, %c0_0, %c0_1, %c0_2] : memref<1x16x18x4xbf16, #tpu.memory_space<vmem>>, vector<1x16x18x4xbf16>
    %1 = vector.shape_cast %0 : vector<1x16x18x4xbf16> to vector<16x18x4xbf16>
    %c0_3 = arith.constant 0 : index
    %c0_4 = arith.constant 0 : index
    %c0_5 = arith.constant 0 : index
    %c0_6 = arith.constant 0 : index
    %2 = vector.load %arg4[%c0_3, %c0_4, %c0_5, %c0_6] : memref<1x2x18x4xbf16, #tpu.memory_space<vmem>>, vector<1x2x18x4xbf16>
    %3 = vector.shape_cast %2 : vector<1x2x18x4xbf16> to vector<2x18x4xbf16>
    %4 = tpu.concatenate %1, %3 in 0 : vector<16x18x4xbf16>, vector<2x18x4xbf16> -> vector<18x18x4xbf16>
    %5 = vector.extract_strided_slice %4 {offsets = [0, 0, 0], sizes = [16, 16, 4], strides = [1, 1, 1]} : vector<18x18x4xbf16> to vector<16x16x4xbf16>
    %6 = vector.extract_strided_slice %4 {offsets = [0, 1, 0], sizes = [16, 16, 4], strides = [1, 1, 1]} : vector<18x18x4xbf16> to vector<16x16x4xbf16>
    %7 = vector.extract_strided_slice %4 {offsets = [0, 2, 0], sizes = [16, 16, 4], strides = [1, 1, 1]} : vector<18x18x4xbf16> to vector<16x16x4xbf16>
    %8 = vector.extract_strided_slice %4 {offsets = [1, 0, 0], sizes = [16, 16, 4], strides = [1, 1, 1]} : vector<18x18x4xbf16> to vector<16x16x4xbf16>
    %9 = vector.extract_strided_slice %4 {offsets = [1, 1, 0], sizes = [16, 16, 4], strides = [1, 1, 1]} : vector<18x18x4xbf16> to vector<16x16x4xbf16>
    %10 = vector.extract_strided_slice %4 {offsets = [1, 2, 0], sizes = [16, 16, 4], strides = [1, 1, 1]} : vector<18x18x4xbf16> to vector<16x16x4xbf16>
    %11 = vector.extract_strided_slice %4 {offsets = [2, 0, 0], sizes = [16, 16, 4], strides = [1, 1, 1]} : vector<18x18x4xbf16> to vector<16x16x4xbf16>
    %12 = vector.extract_strided_slice %4 {offsets = [2, 1, 0], sizes = [16, 16, 4], strides = [1, 1, 1]} : vector<18x18x4xbf16> to vector<16x16x4xbf16>
    %13 = vector.extract_strided_slice %4 {offsets = [2, 2, 0], sizes = [16, 16, 4], strides = [1, 1, 1]} : vector<18x18x4xbf16> to vector<16x16x4xbf16>
    %14 = tpu.concatenate %5, %6, %7, %8, %9, %10, %11, %12, %13 in 2 : vector<16x16x4xbf16>, vector<16x16x4xbf16>, vector<16x16x4xbf16>, vector<16x16x4xbf16>, vector<16x16x4xbf16>, vector<16x16x4xbf16>, vector<16x16x4xbf16>, vector<16x16x4xbf16>, vector<16x16x4xbf16> -> vector<16x16x36xbf16>
    %15 = vector.shape_cast %14 : vector<16x16x36xbf16> to vector<256x36xbf16>
    %c0_7 = arith.constant 0 : index
    %c0_8 = arith.constant 0 : index
    %16 = vector.load %arg5[%c0_7, %c0_8] : memref<36x128xbf16, #tpu.memory_space<vmem>>, vector<36x128xbf16>
    %cst = arith.constant dense<0.000000e+00> : vector<256x128xf32>
    %17 = tpu.matmul %15, %16, %cst {dimension_numbers = #tpu.dot_dimension_numbers<[1], [0], [0], [1], [0, 0, 1, 1], [], []>} : vector<256x36xbf16>, vector<36x128xbf16>, vector<256x128xf32> -> vector<256x128xf32>
    %c0_9 = arith.constant 0 : index
    %c0_10 = arith.constant 0 : index
    %18 = vector.load %arg6[%c0_9, %c0_10] : memref<1x128xf32, #tpu.memory_space<vmem>>, vector<1x128xf32>
    %19 = vector.broadcast %18 : vector<1x128xf32> to vector<256x128xf32>
    %20 = arith.addf %17, %19 : vector<256x128xf32>
    %21 = arith.negf %20 : vector<256x128xf32>
    %22 = math.exp %21 : vector<256x128xf32>
    %cst_11 = arith.constant 1.000000e+00 : f32
    %23 = vector.broadcast %cst_11 : f32 to vector<256x128xf32>
    %24 = arith.addf %23, %22 : vector<256x128xf32>
    %25 = arith.divf %23, %24 : vector<256x128xf32>
    %26 = arith.mulf %20, %25 : vector<256x128xf32>
    %27 = vector.shape_cast %26 : vector<256x128xf32> to vector<1x16x16x128xf32>
    %28 = arith.truncf %27 : vector<1x16x16x128xf32> to vector<1x16x16x128xbf16>
    %c0_12 = arith.constant 0 : index
    %c0_13 = arith.constant 0 : index
    %c0_14 = arith.constant 0 : index
    %c0_15 = arith.constant 0 : index
    %29 = vector.load %arg7[%c0_12, %c0_13, %c0_14, %c0_15] : memref<1x16x16x128xbf16, #tpu.memory_space<vmem>>, vector<1x16x16x128xbf16>
    tpu.vector_store %arg7[%c0_12, %c0_13, %c0_14, %c0_15], %28 {strides = array<i32>} : memref<1x16x16x128xbf16, #tpu.memory_space<vmem>>, vector<1x16x16x128xbf16>,
    return
  }
  func.func @transform_0(%arg0: i32, %arg1: i32, %arg2: i32) -> (i32, i32, i32, i32) {
    %c0_i32 = arith.constant 0 : i32
    %c0_i32_0 = arith.constant 0 : i32
    %c0_i32_1 = arith.constant 0 : i32
    return %arg1, %arg2, %c0_i32, %c0_i32_0 : i32, i32, i32, i32
  }
  func.func @transform_1(%arg0: i32, %arg1: i32, %arg2: i32) -> (i32, i32, i32, i32) {
    %c1_i32 = arith.constant 1 : i32
    %0 = arith.addi %arg2, %c1_i32 : i32
    %c8_i32 = arith.constant 8 : i32
    %1 = arith.muli %0, %c8_i32 : i32
    %c0_i32 = arith.constant 0 : i32
    %c0_i32_0 = arith.constant 0 : i32
    %c0_i32_1 = arith.constant 0 : i32
    return %arg1, %1, %c0_i32, %c0_i32_0 : i32, i32, i32, i32
  }
  func.func @transform_2(%arg0: i32, %arg1: i32, %arg2: i32) -> (i32, i32) {
    %c0_i32 = arith.constant 0 : i32
    %c0_i32_0 = arith.constant 0 : i32
    return %c0_i32, %arg0 : i32, i32
  }
  func.func @transform_3(%arg0: i32, %arg1: i32, %arg2: i32) -> (i32, i32) {
    %c0_i32 = arith.constant 0 : i32
    %c0_i32_0 = arith.constant 0 : i32
    return %c0_i32, %arg0 : i32, i32
  }
  func.func @transform_4(%arg0: i32, %arg1: i32, %arg2: i32) -> (i32, i32, i32, i32) {
    %c0_i32 = arith.constant 0 : i32
    %c0_i32_0 = arith.constant 0 : i32
    return %arg1, %arg2, %c0_i32, %arg0 : i32, i32, i32, i32
  }
}

</mosaic_0001>

<llo_original>
// kernel: repconv_forward.1
$region0: #{repconv_forward.1}
  #allocation0 [shape = 'u32[]', space=smem, size = 0x4, offset = 0x4, fixed_abs, tag = 'smem constant byte address 0x4 - core index']
  #allocation1 [shape = 'u32[144,128]{1,0:T(1,128)}', space=vmem, size = 0x12000, scoped, tag = 'internal scratch']
  %s0 = inlined_call_operand.vmem [shape: bf16[2,18,18,4], index: 0, kind: input, shape index: {}, may-alias: {0,1}]
  %s1 = inlined_call_operand.vmem [shape: bf16[2,18,18,4], index: 1, kind: input, shape index: {}, may-alias: {0,1}]
  %s2 = inlined_call_operand.vmem [shape: bf16[36,128], index: 2, kind: input, shape index: {}]
  %s3 = inlined_call_operand.vmem [shape: f32[1,128], index: 3, kind: input, shape index: {}]
  %s4 = inlined_call_operand.vmem [shape: bf16[2,16,16,128], index: 4, kind: output, shape index: {}]
  %s5 = sld [smem:[#allocation0]]
  $region49: #{repconv_forward.1} parent=0
    _
  %s7 = ssub.s32 1, %s5
  %s8 = scalar_select 0, %s7, %s5
  loop: start=0, step=1, limit=4
  $region2: #{repconv_forward.1} parent=0 // loop_pre_header
    _
  $region3: #{repconv_forward.1} parent=0 // loop_header
    %s10 = sphi 0, %s14
    %p11 = scmp.ge.s32.totalorder %s10, 4
    %s17 = sphi 0, %s36
    %s18 = sphi 0, %s32
    %s19 = sphi 0, %s28
    %s20 = sphi 0, %s17
    %s21 = sphi 0, %s18
    %s22 = sphi 0, %s19
    %s23 = sphi 0, %s20
    %s24 = sphi 0, %s21
    %s25 = sphi 0, %s22
    %s41 = sphi 0, %s43
    %s44 = sphi 0, %s41
    %s45 = sphi 0, %s44
    %s61 = sphi 0, %s45
    %s73 = sphi 0, %s75
    %s76 = sphi 0, %s73
    %s77 = sphi 0, %s76
    %s93 = sphi 0, %s77
    %s99 = sphi 0, %s101
    %s102 = sphi 0, %s99
    %s103 = sphi 0, %s102
    %s119 = sphi 0, %s103
    %s125 = sphi 0, %s127
    %s128 = sphi 0, %s125
    %s129 = sphi 0, %s128
    %s145 = sphi 0, %s129
    %s155 = sphi 0, %s157
    %s158 = sphi 0, %s155
    %s159 = sphi 0, %s158
    %s175 = sphi 0, %s159
  $region4: #{repconv_forward.1} parent=0 // loop_header_branch
    %13 = sbr.rel (%p11) target = $region8
  $region5: #{repconv_forward.1} parent=0 // loop_body
    %s15 = ssub.s32 %s10, 1
    %s16 = ssub.s32 %s10, 2
    %s26 = sadd.s32 1, %s19
    %p27 = scmp.ge.s32.totalorder %s26, 1
    %s28 = scalar_select %p27, 0, %s26
    %s29 = sadd.s32 1, %s18
    %s30 = scalar_select %p27, %s29, %s18
    %p31 = scmp.ge.s32.totalorder %s30, 2
    %s32 = scalar_select %p31, 0, %s30
    %s33 = sadd.s32 1, %s17
    %s34 = scalar_select %p31, %s33, %s17
    %p35 = scmp.ge.s32.totalorder %s34, 1
    %s36 = scalar_select %p35, 0, %s34
    %s37 = ssub.s32 %s18, %s32
    %s38 = ssub.s32 %s19, %s28
    %s39 = sor.u32 %s37, %s38
    %p40 = scmp.eq.s32.totalorder %s39, 0
    %s42 = sadd.s32 %s41, 1
    %s43 = scalar_select %p40, %s41, %s42
    %p46 = pneg %p40
    %p47 = scmp.eq.s32.totalorder %s10, 1
    %p48 = por %p46, %p47
    %p49 = scmp.ne.s32.totalorder %s41, %s44
    %p50 = scmp.eq.s32.totalorder %s10, 0
    %p51 = por %p49, %p50
    %p52 = scmp.ne.s32.totalorder %s41, %s44
    %p53 = scmp.eq.s32.totalorder %s15, 1
    %p54 = por %p52, %p53
    %p55 = scmp.ne.s32.totalorder %s44, %s45
    %p56 = scmp.eq.s32.totalorder %s15, 0
    %p57 = por %p55, %p56
    %p58 = scmp.ne.s32.totalorder %s44, %s45
    %p59 = scmp.eq.s32.totalorder %s16, 1
    %p60 = por %p58, %p59
    %p62 = scmp.ne.s32.totalorder %s45, %s61
    %p63 = scmp.eq.s32.totalorder %s16, 0
    %p64 = por %p62, %p63
    %s65 = sadd.s32 %s19, 1
    %s66 = smul.u32 %s65, 8
    %s67 = sadd.s32 %s28, 1
    %s68 = smul.u32 %s67, 8
    %s69 = ssub.s32 %s18, %s32
    %s70 = ssub.s32 %s66, %s68
    %s71 = sor.u32 %s69, %s70
    %p72 = scmp.eq.s32.totalorder %s71, 0
    %s74 = sadd.s32 %s73, 1
    %s75 = scalar_select %p72, %s73, %s74
    %p78 = pneg %p72
    %p79 = scmp.eq.s32.totalorder %s10, 1
    %p80 = por %p78, %p79
    %p81 = scmp.ne.s32.totalorder %s73, %s76
    %p82 = scmp.eq.s32.totalorder %s10, 0
    %p83 = por %p81, %p82
    %p84 = scmp.ne.s32.totalorder %s73, %s76
    %p85 = scmp.eq.s32.totalorder %s15, 1
    %p86 = por %p84, %p85
    %p87 = scmp.ne.s32.totalorder %s76, %s77
    %p88 = scmp.eq.s32.totalorder %s15, 0
    %p89 = por %p87, %p88
    %p90 = scmp.ne.s32.totalorder %s76, %s77
    %p91 = scmp.eq.s32.totalorder %s16, 1
    %p92 = por %p90, %p91
    %p94 = scmp.ne.s32.totalorder %s77, %s93
    %p95 = scmp.eq.s32.totalorder %s16, 0
    %p96 = por %p94, %p95
    %s97 = ssub.s32 %s17, %s36
    %p98 = scmp.eq.s32.totalorder %s97, 0
    %s100 = sadd.s32 %s99, 1
    %s101 = scalar_select %p98, %s99, %s100
    %p104 = pneg %p98
    %p105 = scmp.eq.s32.totalorder %s10, 1
    %p106 = por %p104, %p105
    %p107 = scmp.ne.s32.totalorder %s99, %s102
    %p108 = scmp.eq.s32.totalorder %s10, 0
    %p109 = por %p107, %p108
    %p110 = scmp.ne.s32.totalorder %s99, %s102
    %p111 = scmp.eq.s32.totalorder %s15, 1
    %p112 = por %p110, %p111
    %p113 = scmp.ne.s32.totalorder %s102, %s103
    %p114 = scmp.eq.s32.totalorder %s15, 0
    %p115 = por %p113, %p114
    %p116 = scmp.ne.s32.totalorder %s102, %s103
    %p117 = scmp.eq.s32.totalorder %s16, 1
    %p118 = por %p116, %p117
    %p120 = scmp.ne.s32.totalorder %s103, %s119
    %p121 = scmp.eq.s32.totalorder %s16, 0
    %p122 = por %p120, %p121
    %s123 = ssub.s32 %s17, %s36
    %p124 = scmp.eq.s32.totalorder %s123, 0
    %s126 = sadd.s32 %s125, 1
    %s127 = scalar_select %p124, %s125, %s126
    %p130 = pneg %p124
    %p131 = scmp.eq.s32.totalorder %s10, 1
    %p132 = por %p130, %p131
    %p133 = scmp.ne.s32.totalorder %s125, %s128
    %p134 = scmp.eq.s32.totalorder %s10, 0
    %p135 = por %p133, %p134
    %p136 = scmp.ne.s32.totalorder %s125, %s128
    %p137 = scmp.eq.s32.totalorder %s15, 1
    %p138 = por %p136, %p137
    %p139 = scmp.ne.s32.totalorder %s128, %s129
    %p140 = scmp.eq.s32.totalorder %s15, 0
    %p141 = por %p139, %p140
    %p142 = scmp.ne.s32.totalorder %s128, %s129
    %p143 = scmp.eq.s32.totalorder %s16, 1
    %p144 = por %p142, %p143
    %p146 = scmp.ne.s32.totalorder %s129, %s145
    %p147 = scmp.eq.s32.totalorder %s16, 0
    %p148 = por %p146, %p147
    %s149 = ssub.s32 %s18, %s32
    %s150 = ssub.s32 %s19, %s28
    %s151 = sor.u32 %s149, %s150
    %s152 = ssub.s32 %s17, %s36
    %s153 = sor.u32 %s151, %s152
    %p154 = scmp.eq.s32.totalorder %s153, 0
    %s156 = sadd.s32 %s155, 1
    %s157 = scalar_select %p154, %s155, %s156
    %p160 = pneg %p154
    %p161 = scmp.eq.s32.totalorder %s10, 1
    %p162 = por %p160, %p161
    %p163 = scmp.ne.s32.totalorder %s155, %s158
    %p164 = scmp.eq.s32.totalorder %s10, 0
    %p165 = por %p163, %p164
    %p166 = scmp.ne.s32.totalorder %s155, %s158
    %p167 = scmp.eq.s32.totalorder %s15, 1
    %p168 = por %p166, %p167
    %p169 = scmp.ne.s32.totalorder %s158, %s159
    %p170 = scmp.eq.s32.totalorder %s15, 0
    %p171 = por %p169, %p170
    %p172 = scmp.ne.s32.totalorder %s158, %s159
    %p173 = scmp.eq.s32.totalorder %s16, 1
    %p174 = por %p172, %p173
    %p176 = scmp.ne.s32.totalorder %s159, %s175
    %p177 = scmp.eq.s32.totalorder %s16, 0
    %p178 = por %p176, %p177
    %p179 = scmp.le.s32.totalorder 1, %s10
    %p180 = scmp.lt.s32.totalorder %s10, 3
    %p181 = pnand %p179, %p180
    %p182 = pneg %p181
    // Predicated region
    $region9: #{repconv_forward.1} parent=5 // pred_check
      _
    $region10: #{repconv_forward.1} parent=5 // pred_check_branch
      %184 = sbr.rel (%p181) target = $region12
    $region11: #{repconv_forward.1} parent=5 // pred_region
      %s185 = ssub.s32 %s10, 1
      // Predicated region
      $region13: #{repconv_forward.1} parent=11 // pred_check
        %p186 = pneg %p115
      $region14: #{repconv_forward.1} parent=11 // pred_check_branch
        %188 = sbr.rel (%p186) target = $region16
      $region15: #{repconv_forward.1} parent=11 // pred_region
        %p189 = scmp.lt.s32.totalorder %s20, 0
        %s190 = scalar_select %p189, %s20, 0
        %s191 = smul.addr %s190, 4
        %s192 = scalar_lea.vmem %s2, %s191
      $region16: #{repconv_forward.1} parent=11 // pred_fallthru
        _
      // Predicated region
      $region17: #{repconv_forward.1} parent=11 // pred_check
        %p193 = pneg %p141
      $region18: #{repconv_forward.1} parent=11 // pred_check_branch
        %195 = sbr.rel (%p193) target = $region20
      $region19: #{repconv_forward.1} parent=11 // pred_region
        %p196 = scmp.lt.s32.totalorder %s20, 0
        %s197 = scalar_select %p196, %s20, 0
        %s198 = scalar_lea.vmem %s3, %s197
      $region20: #{repconv_forward.1} parent=11 // pred_fallthru
        _
    $region12: #{repconv_forward.1} parent=5 // pred_fallthru
      _
    %p199 = scmp.lt.s32.totalorder %s10, 2
    // Predicated region
    $region21: #{repconv_forward.1} parent=5 // pred_check
      %p200 = pneg %p199
    $region22: #{repconv_forward.1} parent=5 // pred_check_branch
      %202 = sbr.rel (%p200) target = $region24
    $region23: #{repconv_forward.1} parent=5 // pred_region
      // Predicated region
      $region25: #{repconv_forward.1} parent=23 // pred_check
        %p203 = pneg %p51
      $region26: #{repconv_forward.1} parent=23 // pred_check_branch
        %205 = sbr.rel (%p203) target = $region28
      $region27: #{repconv_forward.1} parent=23 // pred_region
        %s206 = smul.u32 16, %s19
        %s207 = ssub.s32 18, %s206
        %p208 = scmp.lt.s32.totalorder %s207, 16
        %s209 = scalar_select %p208, %s207, 16
        %s210 = smul.u32 64, %s209
        %s211 = smul.u32 %s210, 3
        %p212 = scmp.lt.s32.totalorder %s18, 1
        %s213 = scalar_select %p212, %s18, 1
        %p214 = scmp.lt.s32.totalorder %s206, 17
        %s215 = scalar_select %p214, %s206, 17
        %s216 = smul.addr %s215, 3
        %s217 = smul.addr %s213, 54
        %s218 = sadd.s32 %s216, %s217
        %s219 = smul.addr %s218, 4
        %s220 = scalar_lea.vmem %s0, %s219
        %s221 = smul.u32 16, %s19
        %s222 = ssub.s32 18, %s221
        %p223 = scmp.lt.s32.totalorder %s222, 16
        %s224 = scalar_select %p223, %s222, 16
        %s225 = smul.u32 64, %s224
        %s226 = smul.u32 %s225, 3
      $region28: #{repconv_forward.1} parent=23 // pred_fallthru
        _
      // Predicated region
      $region29: #{repconv_forward.1} parent=23 // pred_check
        %p227 = pneg %p83
      $region30: #{repconv_forward.1} parent=23 // pred_check_branch
        %229 = sbr.rel (%p227) target = $region32
      $region31: #{repconv_forward.1} parent=23 // pred_region
        %s230 = sadd.s32 %s19, 1
        %s231 = smul.u32 %s230, 8
        %s232 = smul.u32 2, %s231
        %p233 = scmp.lt.s32.totalorder %s18, 1
        %s234 = scalar_select %p233, %s18, 1
        %p235 = scmp.lt.s32.totalorder %s232, 17
        %s236 = scalar_select %p235, %s232, 17
        %s237 = smul.addr %s236, 3
        %s238 = smul.addr %s234, 54
        %s239 = sadd.s32 %s237, %s238
        %s240 = smul.addr %s239, 4
        %s241 = scalar_lea.vmem %s1, %s240
        %s242 = sadd.s32 %s19, 1
        %s243 = smul.u32 %s242, 8
        %s244 = smul.u32 2, %s243
      $region32: #{repconv_forward.1} parent=23 // pred_fallthru
        _
    $region24: #{repconv_forward.1} parent=5 // pred_fallthru
      _
    %p245 = scmp.le.s32.totalorder 1, %s10
    %p246 = scmp.lt.s32.totalorder %s10, 3
    %p247 = pnand %p245, %p246
    %p248 = pneg %p247
    // Predicated region
    $region33: #{repconv_forward.1} parent=5 // pred_check
      _
    $region34: #{repconv_forward.1} parent=5 // pred_check_branch
      %250 = sbr.rel (%p247) target = $region36
    $region35: #{repconv_forward.1} parent=5 // pred_region
      %s251 = ssub.s32 %s10, 1
      %s252 = smul.u32 16, %s22
      %s253 = ssub.s32 18, %s252
      %p254 = scmp.lt.s32.totalorder %s253, 16
      %s255 = scalar_select %p254, %s253, 16
      %s256 = smul.u32 64, %s255
      %s257 = smul.u32 %s256, 3
      %p258 = scmp.lt.s32.totalorder %s21, 1
      %s259 = scalar_select %p258, %s21, 1
      %p260 = scmp.lt.s32.totalorder %s252, 17
      %s261 = scalar_select %p260, %s252, 17
      %s262 = smul.addr %s261, 3
      %s263 = smul.addr %s259, 54
      %s264 = sadd.s32 %s262, %s263
      %s265 = smul.addr %s264, 4
      %s266 = scalar_lea.vmem %s0, %s265
      %p267 = pneg %p57
      %p268 = pneg %p54
      %s269 = sadd.s32 %s22, 1
      %s270 = smul.u32 %s269, 8
      %s271 = smul.u32 2, %s270
      %p272 = scmp.lt.s32.totalorder %s21, 1
      %s273 = scalar_select %p272, %s21, 1
      %p274 = scmp.lt.s32.totalorder %s271, 17
      %s275 = scalar_select %p274, %s271, 17
      %s276 = smul.addr %s275, 3
      %s277 = smul.addr %s273, 54
      %s278 = sadd.s32 %s276, %s277
      %s279 = smul.addr %s278, 4
      %s280 = scalar_lea.vmem %s1, %s279
      %p281 = pneg %p89
      %p282 = pneg %p86
      %p283 = scmp.lt.s32.totalorder %s20, 0
      %s284 = scalar_select %p283, %s20, 0
      %s285 = smul.addr %s284, 4
      %s286 = scalar_lea.vmem %s2, %s285
      %p287 = pneg %p115
      %p288 = pneg %p112
      %p289 = scmp.lt.s32.totalorder %s20, 0
      %s290 = scalar_select %p289, %s20, 0
      %s291 = scalar_lea.vmem %s3, %s290
      %p292 = pneg %p141
      %p293 = pneg %p138
      %p294 = pneg %p171
      %p295 = pneg %p168
      %s296 = smul.u32 16, %s22
      %p297 = scmp.lt.s32.totalorder %s21, 1
      %s298 = scalar_select %p297, %s21, 1
      %p299 = scmp.lt.s32.totalorder %s296, 15
      %s300 = scalar_select %p299, %s296, 15
      %p301 = scmp.lt.s32.totalorder %s20, 0
      %s302 = scalar_select %p301, %s20, 0
      %s303 = smul.addr %s300, 2
      %s304 = sadd.s32 %s302, %s303
      %s305 = smul.addr %s298, 32
      %s306 = sadd.s32 %s304, %s305
      %s307 = smul.addr %s306, 4
      %s308 = scalar_lea.vmem %s4, %s307
      %s309 = smul.u32 16, %s22
      %s310 = ssub.s32 18, %s309
      %p311 = scmp.lt.s32.totalorder %s310, 16
      %s312 = scalar_select %p311, %s310, 16
      %s313 = smul.u32 64, %s312
      %s314 = smul.u32 %s313, 3
      %p315 = scmp.lt.s32.totalorder %s21, 1
      %s316 = scalar_select %p315, %s21, 1
      %p317 = scmp.lt.s32.totalorder %s309, 17
      %s318 = scalar_select %p317, %s309, 17
      %s319 = smul.addr %s318, 3
      %s320 = smul.addr %s316, 54
      %s321 = sadd.s32 %s319, %s320
      %s322 = smul.addr %s321, 4
      %s323 = scalar_lea.vmem %s0, %s322
      %s324 = smul.u32 16, %s22
      %s325 = ssub.s32 18, %s324
      %p326 = scmp.lt.s32.totalorder %s325, 16
      %s327 = scalar_select %p326, %s325, 16
      %s328 = smul.u32 64, %s327
      %s329 = smul.u32 %s328, 3
      %s330 = sadd.s32 %s22, 1
      %s331 = smul.u32 %s330, 8
      %s332 = smul.u32 2, %s331
      %p333 = scmp.lt.s32.totalorder %s21, 1
      %s334 = scalar_select %p333, %s21, 1
      %p335 = scmp.lt.s32.totalorder %s332, 17
      %s336 = scalar_select %p335, %s332, 17
      %s337 = smul.addr %s336, 3
      %s338 = smul.addr %s334, 54
      %s339 = sadd.s32 %s337, %s338
      %s340 = smul.addr %s339, 4
      %s341 = scalar_lea.vmem %s1, %s340
      %s342 = sadd.s32 %s22, 1
      %s343 = smul.u32 %s342, 8
      %s344 = smul.u32 2, %s343
      %p345 = scmp.lt.s32.totalorder %s20, 0
      %s346 = scalar_select %p345, %s20, 0
      %s347 = smul.addr %s346, 4
      %s348 = scalar_lea.vmem %s2, %s347
      %p349 = scmp.lt.s32.totalorder %s20, 0
      %s350 = scalar_select %p349, %s20, 0
      %s351 = scalar_lea.vmem %s3, %s350
      %s352 = smul.u32 16, %s22
      %p353 = scmp.lt.s32.totalorder %s21, 1
      %s354 = scalar_select %p353, %s21, 1
      %p355 = scmp.lt.s32.totalorder %s352, 15
      %s356 = scalar_select %p355, %s352, 15
      %p357 = scmp.lt.s32.totalorder %s20, 0
      %s358 = scalar_select %p357, %s20, 0
      %s359 = smul.addr %s356, 2
      %s360 = sadd.s32 %s358, %s359
      %s361 = smul.addr %s354, 32
      %s362 = sadd.s32 %s360, %s361
      %s363 = smul.addr %s362, 4
      %s364 = scalar_lea.vmem %s4, %s363
      %s365 = smul.u32 16, %s22
      %v367 = vld [vmem:[%s323] sm:$0xf]
      %v368 = vld [vmem:[%s323 + $0x4] sm:$0xf]
      %v369 = vld [vmem:[%s323 + $0x8] sm:$0x1]
      %v370 = vld [vmem:[%s323 + $0xc] sm:$0xf]
      %v371 = vld [vmem:[%s323 + $0x10] sm:$0xf]
      %v372 = vld [vmem:[%s323 + $0x14] sm:$0x1]
      %v373 = vld [vmem:[%s323 + $0x18] sm:$0xf]
      %v374 = vld [vmem:[%s323 + $0x1c] sm:$0xf]
      %v375 = vld [vmem:[%s323 + $0x20] sm:$0x1]
      %v376 = vld [vmem:[%s323 + $0x24] sm:$0xf]
      %v377 = vld [vmem:[%s323 + $0x28] sm:$0xf]
      %v378 = vld [vmem:[%s323 + $0x2c] sm:$0x1]
      %v379 = vld [vmem:[%s323 + $0x30] sm:$0xf]
      %v380 = vld [vmem:[%s323 + $0x34] sm:$0xf]
      %v381 = vld [vmem:[%s323 + $0x38] sm:$0x1]
      %v382 = vld [vmem:[%s323 + $0x3c] sm:$0xf]
      %v383 = vld [vmem:[%s323 + $0x40] sm:$0xf]
      %v384 = vld [vmem:[%s323 + $0x44] sm:$0x1]
      %v385 = vld [vmem:[%s323 + $0x48] sm:$0xf]
      %v386 = vld [vmem:[%s323 + $0x4c] sm:$0xf]
      %v387 = vld [vmem:[%s323 + $0x50] sm:$0x1]
      %v388 = vld [vmem:[%s323 + $0x54] sm:$0xf]
      %v389 = vld [vmem:[%s323 + $0x58] sm:$0xf]
      %v390 = vld [vmem:[%s323 + $0x5c] sm:$0x1]
      %v391 = vld [vmem:[%s323 + $0x60] sm:$0xf]
      %v392 = vld [vmem:[%s323 + $0x64] sm:$0xf]
      %v393 = vld [vmem:[%s323 + $0x68] sm:$0x1]
      %v394 = vld [vmem:[%s323 + $0x6c] sm:$0xf]
      %v395 = vld [vmem:[%s323 + $0x70] sm:$0xf]
      %v396 = vld [vmem:[%s323 + $0x74] sm:$0x1]
      %v397 = vld [vmem:[%s323 + $0x78] sm:$0xf]
      %v398 = vld [vmem:[%s323 + $0x7c] sm:$0xf]
      %v399 = vld [vmem:[%s323 + $0x80] sm:$0x1]
      %v400 = vld [vmem:[%s323 + $0x84] sm:$0xf]
      %v401 = vld [vmem:[%s323 + $0x88] sm:$0xf]
      %v402 = vld [vmem:[%s323 + $0x8c] sm:$0x1]
      %v403 = vld [vmem:[%s323 + $0x90] sm:$0xf]
      %v404 = vld [vmem:[%s323 + $0x94] sm:$0xf]
      %v405 = vld [vmem:[%s323 + $0x98] sm:$0x1]
      %v406 = vld [vmem:[%s323 + $0x9c] sm:$0xf]
      %v407 = vld [vmem:[%s323 + $0xa0] sm:$0xf]
      %v408 = vld [vmem:[%s323 + $0xa4] sm:$0x1]
      %v409 = vld [vmem:[%s323 + $0xa8] sm:$0xf]
      %v410 = vld [vmem:[%s323 + $0xac] sm:$0xf]
      %v411 = vld [vmem:[%s323 + $0xb0] sm:$0x1]
      %v412 = vld [vmem:[%s323 + $0xb4] sm:$0xf]
      %v413 = vld [vmem:[%s323 + $0xb8] sm:$0xf]
      %v414 = vld [vmem:[%s323 + $0xbc] sm:$0x1]
      %v415 = vld [vmem:[%s341] sm:$0xf]
      %v416 = vld [vmem:[%s341 + $0x4] sm:$0xf]
      %v417 = vld [vmem:[%s341 + $0x8] sm:$0x1]
      %v418 = vld [vmem:[%s341 + $0xc] sm:$0xf]
      %v419 = vld [vmem:[%s341 + $0x10] sm:$0xf]
      %v420 = vld [vmem:[%s341 + $0x14] sm:$0x1]
      %v453 = vunpack.c.l.b16 %v367
      %v454 = vunpack.c.l.b16 %v368
      %v455 = vunpack.c.l.b16 %v370
      %v456 = vunpack.c.l.b16 %v371
      %v457 = vunpack.c.l.b16 %v373
      %v458 = vunpack.c.l.b16 %v374
      %v459 = vunpack.c.l.b16 %v376
      %v460 = vunpack.c.l.b16 %v377
      %v461 = vunpack.c.l.b16 %v379
      %v462 = vunpack.c.l.b16 %v380
      %v463 = vunpack.c.l.b16 %v382
      %v464 = vunpack.c.l.b16 %v383
      %v465 = vunpack.c.l.b16 %v385
      %v466 = vunpack.c.l.b16 %v386
      %v467 = vunpack.c.l.b16 %v388
      %v468 = vunpack.c.l.b16 %v389
      %v469 = vunpack.c.l.b16 %v391
      %v470 = vunpack.c.l.b16 %v392
      %v471 = vunpack.c.l.b16 %v394
      %v472 = vunpack.c.l.b16 %v395
      %v473 = vunpack.c.l.b16 %v397
      %v474 = vunpack.c.l.b16 %v398
      %v475 = vunpack.c.l.b16 %v400
      %v476 = vunpack.c.l.b16 %v401
      %v477 = vunpack.c.l.b16 %v403
      %v478 = vunpack.c.l.b16 %v404
      %v479 = vunpack.c.l.b16 %v406
      %v480 = vunpack.c.l.b16 %v407
      %v481 = vunpack.c.l.b16 %v409
      %v482 = vunpack.c.l.b16 %v410
      %v483 = vunpack.c.l.b16 %v412
      %v484 = vunpack.c.l.b16 %v413
      %v485 = vpack.c.b16 %v454, %v453
      %v486 = vpack.c.b16 %v456, %v455
      %v487 = vpack.c.b16 %v458, %v457
      %v488 = vpack.c.b16 %v460, %v459
      %v489 = vpack.c.b16 %v462, %v461
      %v490 = vpack.c.b16 %v464, %v463
      %v491 = vpack.c.b16 %v466, %v465
      %v492 = vpack.c.b16 %v468, %v467
      %v493 = vpack.c.b16 %v470, %v469
      %v494 = vpack.c.b16 %v472, %v471
      %v495 = vpack.c.b16 %v474, %v473
      %v496 = vpack.c.b16 %v476, %v475
      %v497 = vpack.c.b16 %v478, %v477
      %v498 = vpack.c.b16 %v480, %v479
      %v499 = vpack.c.b16 %v482, %v481
      %v500 = vpack.c.b16 %v484, %v483
      %v517 = vunpack.c.l.b16 %v369
      %v518 = vunpack.c.l.b16 %v372
      %v519 = vunpack.c.l.b16 %v375
      %v520 = vunpack.c.l.b16 %v378
      %v521 = vunpack.c.l.b16 %v381
      %v522 = vunpack.c.l.b16 %v384
      %v523 = vunpack.c.l.b16 %v387
      %v524 = vunpack.c.l.b16 %v390
      %v525 = vunpack.c.l.b16 %v393
      %v526 = vunpack.c.l.b16 %v396
      %v527 = vunpack.c.l.b16 %v399
      %v528 = vunpack.c.l.b16 %v402
      %v529 = vunpack.c.l.b16 %v405
      %v530 = vunpack.c.l.b16 %v408
      %v531 = vunpack.c.l.b16 %v411
      %v532 = vunpack.c.l.b16 %v414
      %v533 = vpack.c.b16 %v517, %v517
      %v534 = vpack.c.b16 %v518, %v518
      %v535 = vpack.c.b16 %v519, %v519
      %v536 = vpack.c.b16 %v520, %v520
      %v537 = vpack.c.b16 %v521, %v521
      %v538 = vpack.c.b16 %v522, %v522
      %v539 = vpack.c.b16 %v523, %v523
      %v540 = vpack.c.b16 %v524, %v524
      %v541 = vpack.c.b16 %v525, %v525
      %v542 = vpack.c.b16 %v526, %v526
      %v543 = vpack.c.b16 %v527, %v527
      %v544 = vpack.c.b16 %v528, %v528
      %v545 = vpack.c.b16 %v529, %v529
      %v546 = vpack.c.b16 %v530, %v530
      %v547 = vpack.c.b16 %v531, %v531
      %v548 = vpack.c.b16 %v532, %v532
      %vm549 = vsmask.f32 7424
      %v551 = vshrl.u32 %v485, 16
      %v553 = vshll.u32 %v485, 16
      %v555 = vrot.slane %v553, 1
      %v556 = vor.u32 %v551, %v555
      %v558 = vshll.u32 %v533, 16
      %v560 = vrot.slane %v558, 1
      %v561 = vsel %vm549, %v556, %v560
      %v563 = vshrl.u32 %v486, 16
      %v565 = vshll.u32 %v486, 16
      %v567 = vrot.slane %v565, 1
      %v568 = vor.u32 %v563, %v567
      %v570 = vshll.u32 %v534, 16
      %v572 = vrot.slane %v570, 1
      %v573 = vsel %vm549, %v568, %v572
      %v575 = vshrl.u32 %v487, 16
      %v577 = vshll.u32 %v487, 16
      %v579 = vrot.slane %v577, 1
      %v580 = vor.u32 %v575, %v579
      %v582 = vshll.u32 %v535, 16
      %v584 = vrot.slane %v582, 1
      %v585 = vsel %vm549, %v580, %v584
      %v587 = vshrl.u32 %v488, 16
      %v589 = vshll.u32 %v488, 16
      %v591 = vrot.slane %v589, 1
      %v592 = vor.u32 %v587, %v591
      %v594 = vshll.u32 %v536, 16
      %v596 = vrot.slane %v594, 1
      %v597 = vsel %vm549, %v592, %v596
      %v599 = vshrl.u32 %v489, 16
      %v601 = vshll.u32 %v489, 16
      %v603 = vrot.slane %v601, 1
      %v604 = vor.u32 %v599, %v603
      %v606 = vshll.u32 %v537, 16
      %v608 = vrot.slane %v606, 1
      %v609 = vsel %vm549, %v604, %v608
      %v611 = vshrl.u32 %v490, 16
      %v613 = vshll.u32 %v490, 16
      %v615 = vrot.slane %v613, 1
      %v616 = vor.u32 %v611, %v615
      %v618 = vshll.u32 %v538, 16
      %v620 = vrot.slane %v618, 1
      %v621 = vsel %vm549, %v616, %v620
      %v623 = vshrl.u32 %v491, 16
      %v625 = vshll.u32 %v491, 16
      %v627 = vrot.slane %v625, 1
      %v628 = vor.u32 %v623, %v627
      %v630 = vshll.u32 %v539, 16
      %v632 = vrot.slane %v630, 1
      %v633 = vsel %vm549, %v628, %v632
      %v635 = vshrl.u32 %v492, 16
      %v637 = vshll.u32 %v492, 16
      %v639 = vrot.slane %v637, 1
      %v640 = vor.u32 %v635, %v639
      %v642 = vshll.u32 %v540, 16
      %v644 = vrot.slane %v642, 1
      %v645 = vsel %vm549, %v640, %v644
      %v647 = vshrl.u32 %v493, 16
      %v649 = vshll.u32 %v493, 16
      %v651 = vrot.slane %v649, 1
      %v652 = vor.u32 %v647, %v651
      %v654 = vshll.u32 %v541, 16
      %v656 = vrot.slane %v654, 1
      %v657 = vsel %vm549, %v652, %v656
      %v659 = vshrl.u32 %v494, 16
      %v661 = vshll.u32 %v494, 16
      %v663 = vrot.slane %v661, 1
      %v664 = vor.u32 %v659, %v663
      %v666 = vshll.u32 %v542, 16
      %v668 = vrot.slane %v666, 1
      %v669 = vsel %vm549, %v664, %v668
      %v671 = vshrl.u32 %v495, 16
      %v673 = vshll.u32 %v495, 16
      %v675 = vrot.slane %v673, 1
      %v676 = vor.u32 %v671, %v675
      %v678 = vshll.u32 %v543, 16
      %v680 = vrot.slane %v678, 1
      %v681 = vsel %vm549, %v676, %v680
      %v683 = vshrl.u32 %v496, 16
      %v685 = vshll.u32 %v496, 16
      %v687 = vrot.slane %v685, 1
      %v688 = vor.u32 %v683, %v687
      %v690 = vshll.u32 %v544, 16
      %v692 = vrot.slane %v690, 1
      %v693 = vsel %vm549, %v688, %v692
      %v695 = vshrl.u32 %v497, 16
      %v697 = vshll.u32 %v497, 16
      %v699 = vrot.slane %v697, 1
      %v700 = vor.u32 %v695, %v699
      %v702 = vshll.u32 %v545, 16
      %v704 = vrot.slane %v702, 1
      %v705 = vsel %vm549, %v700, %v704
      %v707 = vshrl.u32 %v498, 16
      %v709 = vshll.u32 %v498, 16
      %v711 = vrot.slane %v709, 1
      %v712 = vor.u32 %v707, %v711
      %v714 = vshll.u32 %v546, 16
      %v716 = vrot.slane %v714, 1
      %v717 = vsel %vm549, %v712, %v716
      %v719 = vshrl.u32 %v499, 16
      %v721 = vshll.u32 %v499, 16
      %v723 = vrot.slane %v721, 1
      %v724 = vor.u32 %v719, %v723
      %v726 = vshll.u32 %v547, 16
      %v728 = vrot.slane %v726, 1
      %v729 = vsel %vm549, %v724, %v728
      %v731 = vshrl.u32 %v500, 16
      %v733 = vshll.u32 %v500, 16
      %v735 = vrot.slane %v733, 1
      %v736 = vor.u32 %v731, %v735
      %v738 = vshll.u32 %v548, 16
      %v740 = vrot.slane %v738, 1
      %v741 = vsel %vm549, %v736, %v740
      %742 = vrot.lane.b32.xlu0 %v561, 4
      %v743 = vpop.permute.xlu0 %742
      %744 = vrot.lane.b32.xlu0 %v573, 4
      %v745 = vpop.permute.xlu0 %744
      %746 = vrot.lane.b32.xlu0 %v585, 4
      %v747 = vpop.permute.xlu0 %746
      %748 = vrot.lane.b32.xlu0 %v597, 4
      %v749 = vpop.permute.xlu0 %748
      %750 = vrot.lane.b32.xlu0 %v609, 4
      %v751 = vpop.permute.xlu0 %750
      %752 = vrot.lane.b32.xlu0 %v621, 4
      %v753 = vpop.permute.xlu0 %752
      %754 = vrot.lane.b32.xlu0 %v633, 4
      %v755 = vpop.permute.xlu0 %754
      %756 = vrot.lane.b32.xlu0 %v645, 4
      %v757 = vpop.permute.xlu0 %756
      %758 = vrot.lane.b32.xlu0 %v657, 4
      %v759 = vpop.permute.xlu0 %758
      %760 = vrot.lane.b32.xlu0 %v669, 4
      %v761 = vpop.permute.xlu0 %760
      %762 = vrot.lane.b32.xlu0 %v681, 4
      %v763 = vpop.permute.xlu0 %762
      %764 = vrot.lane.b32.xlu0 %v693, 4
      %v765 = vpop.permute.xlu0 %764
      %766 = vrot.lane.b32.xlu0 %v705, 4
      %v767 = vpop.permute.xlu0 %766
      %768 = vrot.lane.b32.xlu0 %v717, 4
      %v769 = vpop.permute.xlu0 %768
      %770 = vrot.lane.b32.xlu0 %v729, 4
      %v771 = vpop.permute.xlu0 %770
      %772 = vrot.lane.b32.xlu0 %v741, 4
      %v773 = vpop.permute.xlu0 %772
      %vm774 = vcmask 1046528
      %v775 = vrot.slane %v485, 1
      %v776 = vrot.slane %v533, 1
      %v777 = vsel %vm774, %v775, %v776
      %v778 = vrot.slane %v486, 1
      %v779 = vrot.slane %v534, 1
      %v780 = vsel %vm774, %v778, %v779
      %v781 = vrot.slane %v487, 1
      %v782 = vrot.slane %v535, 1
      %v783 = vsel %vm774, %v781, %v782
      %v784 = vrot.slane %v488, 1
      %v785 = vrot.slane %v536, 1
      %v786 = vsel %vm774, %v784, %v785
      %v787 = vrot.slane %v489, 1
      %v788 = vrot.slane %v537, 1
      %v789 = vsel %vm774, %v787, %v788
      %v790 = vrot.slane %v490, 1
      %v791 = vrot.slane %v538, 1
      %v792 = vsel %vm774, %v790, %v791
      %v793 = vrot.slane %v491, 1
      %v794 = vrot.slane %v539, 1
      %v795 = vsel %vm774, %v793, %v794
      %v796 = vrot.slane %v492, 1
      %v797 = vrot.slane %v540, 1
      %v798 = vsel %vm774, %v796, %v797
      %v799 = vrot.slane %v493, 1
      %v800 = vrot.slane %v541, 1
      %v801 = vsel %vm774, %v799, %v800
      %v802 = vrot.slane %v494, 1
      %v803 = vrot.slane %v542, 1
      %v804 = vsel %vm774, %v802, %v803
      %v805 = vrot.slane %v495, 1
      %v806 = vrot.slane %v543, 1
      %v807 = vsel %vm774, %v805, %v806
      %v808 = vrot.slane %v496, 1
      %v809 = vrot.slane %v544, 1
      %v810 = vsel %vm774, %v808, %v809
      %v811 = vrot.slane %v497, 1
      %v812 = vrot.slane %v545, 1
      %v813 = vsel %vm774, %v811, %v812
      %v814 = vrot.slane %v498, 1
      %v815 = vrot.slane %v546, 1
      %v816 = vsel %vm774, %v814, %v815
      %v817 = vrot.slane %v499, 1
      %v818 = vrot.slane %v547, 1
      %v819 = vsel %vm774, %v817, %v818
      %v820 = vrot.slane %v500, 1
      %v821 = vrot.slane %v548, 1
      %v822 = vsel %vm774, %v820, %v821
      %823 = vrot.lane.b32.xlu0 %v777, 8
      %v824 = vpop.permute.xlu0 %823
      %825 = vrot.lane.b32.xlu0 %v780, 8
      %v826 = vpop.permute.xlu0 %825
      %827 = vrot.lane.b32.xlu0 %v783, 8
      %v828 = vpop.permute.xlu0 %827
      %829 = vrot.lane.b32.xlu0 %v786, 8
      %v830 = vpop.permute.xlu0 %829
      %831 = vrot.lane.b32.xlu0 %v789, 8
      %v832 = vpop.permute.xlu0 %831
      %833 = vrot.lane.b32.xlu0 %v792, 8
      %v834 = vpop.permute.xlu0 %833
      %835 = vrot.lane.b32.xlu0 %v795, 8
      %v836 = vpop.permute.xlu0 %835
      %837 = vrot.lane.b32.xlu0 %v798, 8
      %v838 = vpop.permute.xlu0 %837
      %839 = vrot.lane.b32.xlu0 %v801, 8
      %v840 = vpop.permute.xlu0 %839
      %841 = vrot.lane.b32.xlu0 %v804, 8
      %v842 = vpop.permute.xlu0 %841
      %843 = vrot.lane.b32.xlu0 %v807, 8
      %v844 = vpop.permute.xlu0 %843
      %845 = vrot.lane.b32.xlu0 %v810, 8
      %v846 = vpop.permute.xlu0 %845
      %847 = vrot.lane.b32.xlu0 %v813, 8
      %v848 = vpop.permute.xlu0 %847
      %849 = vrot.lane.b32.xlu0 %v816, 8
      %v850 = vpop.permute.xlu0 %849
      %851 = vrot.lane.b32.xlu0 %v819, 8
      %v852 = vpop.permute.xlu0 %851
      %853 = vrot.lane.b32.xlu0 %v822, 8
      %v854 = vpop.permute.xlu0 %853
      %v857 = vunpack.c.l.b16 %v415
      %v858 = vunpack.c.l.b16 %v416
      %v859 = vpack.c.b16 %v858, %v857
      %860 = vrot.lane.b32.xlu0 %v486, 12
      %v861 = vpop.permute.xlu0 %860
      %862 = vrot.lane.b32.xlu0 %v487, 12
      %v863 = vpop.permute.xlu0 %862
      %864 = vrot.lane.b32.xlu0 %v488, 12
      %v865 = vpop.permute.xlu0 %864
      %866 = vrot.lane.b32.xlu0 %v489, 12
      %v867 = vpop.permute.xlu0 %866
      %868 = vrot.lane.b32.xlu0 %v490, 12
      %v869 = vpop.permute.xlu0 %868
      %870 = vrot.lane.b32.xlu0 %v491, 12
      %v871 = vpop.permute.xlu0 %870
      %872 = vrot.lane.b32.xlu0 %v492, 12
      %v873 = vpop.permute.xlu0 %872
      %874 = vrot.lane.b32.xlu0 %v493, 12
      %v875 = vpop.permute.xlu0 %874
      %876 = vrot.lane.b32.xlu0 %v494, 12
      %v877 = vpop.permute.xlu0 %876
      %878 = vrot.lane.b32.xlu0 %v495, 12
      %v879 = vpop.permute.xlu0 %878
      %880 = vrot.lane.b32.xlu0 %v496, 12
      %v881 = vpop.permute.xlu0 %880
      %882 = vrot.lane.b32.xlu0 %v497, 12
      %v883 = vpop.permute.xlu0 %882
      %884 = vrot.lane.b32.xlu0 %v498, 12
      %v885 = vpop.permute.xlu0 %884
      %886 = vrot.lane.b32.xlu0 %v499, 12
      %v887 = vpop.permute.xlu0 %886
      %888 = vrot.lane.b32.xlu0 %v500, 12
      %v889 = vpop.permute.xlu0 %888
      %890 = vrot.lane.b32.xlu0 %v859, 12
      %v891 = vpop.permute.xlu0 %890
      %v893 = vunpack.c.l.b16 %v417
      %v894 = vpack.c.b16 %v893, %v893
      %v896 = vshrl.u32 %v859, 16
      %v898 = vshll.u32 %v859, 16
      %v900 = vrot.slane %v898, 1
      %v901 = vor.u32 %v896, %v900
      %v903 = vshll.u32 %v894, 16
      %v905 = vrot.slane %v903, 1
      %v906 = vsel %vm549, %v901, %v905
      %907 = vrot.lane.b32.xlu0 %v573, 16
      %v908 = vpop.permute.xlu0 %907
      %909 = vrot.lane.b32.xlu0 %v585, 16
      %v910 = vpop.permute.xlu0 %909
      %911 = vrot.lane.b32.xlu0 %v597, 16
      %v912 = vpop.permute.xlu0 %911
      %913 = vrot.lane.b32.xlu0 %v609, 16
      %v914 = vpop.permute.xlu0 %913
      %915 = vrot.lane.b32.xlu0 %v621, 16
      %v916 = vpop.permute.xlu0 %915
      %917 = vrot.lane.b32.xlu0 %v633, 16
      %v918 = vpop.permute.xlu0 %917
      %919 = vrot.lane.b32.xlu0 %v645, 16
      %v920 = vpop.permute.xlu0 %919
      %921 = vrot.lane.b32.xlu0 %v657, 16
      %v922 = vpop.permute.xlu0 %921
      %923 = vrot.lane.b32.xlu0 %v669, 16
      %v924 = vpop.permute.xlu0 %923
      %925 = vrot.lane.b32.xlu0 %v681, 16
      %v926 = vpop.permute.xlu0 %925
      %927 = vrot.lane.b32.xlu0 %v693, 16
      %v928 = vpop.permute.xlu0 %927
      %929 = vrot.lane.b32.xlu0 %v705, 16
      %v930 = vpop.permute.xlu0 %929
      %931 = vrot.lane.b32.xlu0 %v717, 16
      %v932 = vpop.permute.xlu0 %931
      %933 = vrot.lane.b32.xlu0 %v729, 16
      %v934 = vpop.permute.xlu0 %933
      %935 = vrot.lane.b32.xlu0 %v741, 16
      %v936 = vpop.permute.xlu0 %935
      %937 = vrot.lane.b32.xlu0 %v906, 16
      %v938 = vpop.permute.xlu0 %937
      %v939 = vrot.slane %v859, 1
      %v940 = vrot.slane %v894, 1
      %v941 = vsel %vm774, %v939, %v940
      %942 = vrot.lane.b32.xlu0 %v780, 20
      %v943 = vpop.permute.xlu0 %942
      %944 = vrot.lane.b32.xlu0 %v783, 20
      %v945 = vpop.permute.xlu0 %944
      %946 = vrot.lane.b32.xlu0 %v786, 20
      %v947 = vpop.permute.xlu0 %946
      %948 = vrot.lane.b32.xlu0 %v789, 20
      %v949 = vpop.permute.xlu0 %948
      %950 = vrot.lane.b32.xlu0 %v792, 20
      %v951 = vpop.permute.xlu0 %950
      %952 = vrot.lane.b32.xlu0 %v795, 20
      %v953 = vpop.permute.xlu0 %952
      %954 = vrot.lane.b32.xlu0 %v798, 20
      %v955 = vpop.permute.xlu0 %954
      %956 = vrot.lane.b32.xlu0 %v801, 20
      %v957 = vpop.permute.xlu0 %956
      %958 = vrot.lane.b32.xlu0 %v804, 20
      %v959 = vpop.permute.xlu0 %958
      %960 = vrot.lane.b32.xlu0 %v807, 20
      %v961 = vpop.permute.xlu0 %960
      %962 = vrot.lane.b32.xlu0 %v810, 20
      %v963 = vpop.permute.xlu0 %962
      %964 = vrot.lane.b32.xlu0 %v813, 20
      %v965 = vpop.permute.xlu0 %964
      %966 = vrot.lane.b32.xlu0 %v816, 20
      %v967 = vpop.permute.xlu0 %966
      %968 = vrot.lane.b32.xlu0 %v819, 20
      %v969 = vpop.permute.xlu0 %968
      %970 = vrot.lane.b32.xlu0 %v822, 20
      %v971 = vpop.permute.xlu0 %970
      %972 = vrot.lane.b32.xlu0 %v941, 20
      %v973 = vpop.permute.xlu0 %972
      %v976 = vunpack.c.l.b16 %v418
      %v977 = vunpack.c.l.b16 %v419
      %v978 = vpack.c.b16 %v977, %v976
      %979 = vrot.lane.b32.xlu0 %v487, 24
      %v980 = vpop.permute.xlu0 %979
      %981 = vrot.lane.b32.xlu0 %v488, 24
      %v982 = vpop.permute.xlu0 %981
      %983 = vrot.lane.b32.xlu0 %v489, 24
      %v984 = vpop.permute.xlu0 %983
      %985 = vrot.lane.b32.xlu0 %v490, 24
      %v986 = vpop.permute.xlu0 %985
      %987 = vrot.lane.b32.xlu0 %v491, 24
      %v988 = vpop.permute.xlu0 %987
      %989 = vrot.lane.b32.xlu0 %v492, 24
      %v990 = vpop.permute.xlu0 %989
      %991 = vrot.lane.b32.xlu0 %v493, 24
      %v992 = vpop.permute.xlu0 %991
      %993 = vrot.lane.b32.xlu0 %v494, 24
      %v994 = vpop.permute.xlu0 %993
      %995 = vrot.lane.b32.xlu0 %v495, 24
      %v996 = vpop.permute.xlu0 %995
      %997 = vrot.lane.b32.xlu0 %v496, 24
      %v998 = vpop.permute.xlu0 %997
      %999 = vrot.lane.b32.xlu0 %v497, 24
      %v1000 = vpop.permute.xlu0 %999
      %1001 = vrot.lane.b32.xlu0 %v498, 24
      %v1002 = vpop.permute.xlu0 %1001
      %1003 = vrot.lane.b32.xlu0 %v499, 24
      %v1004 = vpop.permute.xlu0 %1003
      %1005 = vrot.lane.b32.xlu0 %v500, 24
      %v1006 = vpop.permute.xlu0 %1005
      %1007 = vrot.lane.b32.xlu0 %v859, 24
      %v1008 = vpop.permute.xlu0 %1007
      %1009 = vrot.lane.b32.xlu0 %v978, 24
      %v1010 = vpop.permute.xlu0 %1009
      %v1012 = vunpack.c.l.b16 %v420
      %v1013 = vpack.c.b16 %v1012, %v1012
      %v1015 = vshrl.u32 %v978, 16
      %v1017 = vshll.u32 %v978, 16
      %v1019 = vrot.slane %v1017, 1
      %v1020 = vor.u32 %v1015, %v1019
      %v1022 = vshll.u32 %v1013, 16
      %v1024 = vrot.slane %v1022, 1
      %v1025 = vsel %vm549, %v1020, %v1024
      %1026 = vrot.lane.b32.xlu0 %v585, 28
      %v1027 = vpop.permute.xlu0 %1026
      %1028 = vrot.lane.b32.xlu0 %v597, 28
      %v1029 = vpop.permute.xlu0 %1028
      %1030 = vrot.lane.b32.xlu0 %v609, 28
      %v1031 = vpop.permute.xlu0 %1030
      %1032 = vrot.lane.b32.xlu0 %v621, 28
      %v1033 = vpop.permute.xlu0 %1032
      %1034 = vrot.lane.b32.xlu0 %v633, 28
      %v1035 = vpop.permute.xlu0 %1034
      %1036 = vrot.lane.b32.xlu0 %v645, 28
      %v1037 = vpop.permute.xlu0 %1036
      %1038 = vrot.lane.b32.xlu0 %v657, 28
      %v1039 = vpop.permute.xlu0 %1038
      %1040 = vrot.lane.b32.xlu0 %v669, 28
      %v1041 = vpop.permute.xlu0 %1040
      %1042 = vrot.lane.b32.xlu0 %v681, 28
      %v1043 = vpop.permute.xlu0 %1042
      %1044 = vrot.lane.b32.xlu0 %v693, 28
      %v1045 = vpop.permute.xlu0 %1044
      %1046 = vrot.lane.b32.xlu0 %v705, 28
      %v1047 = vpop.permute.xlu0 %1046
      %1048 = vrot.lane.b32.xlu0 %v717, 28
      %v1049 = vpop.permute.xlu0 %1048
      %1050 = vrot.lane.b32.xlu0 %v729, 28
      %v1051 = vpop.permute.xlu0 %1050
      %1052 = vrot.lane.b32.xlu0 %v741, 28
      %v1053 = vpop.permute.xlu0 %1052
      %1054 = vrot.lane.b32.xlu0 %v906, 28
      %v1055 = vpop.permute.xlu0 %1054
      %1056 = vrot.lane.b32.xlu0 %v1025, 28
      %v1057 = vpop.permute.xlu0 %1056
      %v1058 = vrot.slane %v978, 1
      %v1059 = vrot.slane %v1013, 1
      %v1060 = vsel %vm774, %v1058, %v1059
      %1061 = vrot.lane.b32.xlu0 %v783, 32
      %v1062 = vpop.permute.xlu0 %1061
      %1063 = vrot.lane.b32.xlu0 %v786, 32
      %v1064 = vpop.permute.xlu0 %1063
      %1065 = vrot.lane.b32.xlu0 %v789, 32
      %v1066 = vpop.permute.xlu0 %1065
      %1067 = vrot.lane.b32.xlu0 %v792, 32
      %v1068 = vpop.permute.xlu0 %1067
      %1069 = vrot.lane.b32.xlu0 %v795, 32
      %v1070 = vpop.permute.xlu0 %1069
      %1071 = vrot.lane.b32.xlu0 %v798, 32
      %v1072 = vpop.permute.xlu0 %1071
      %1073 = vrot.lane.b32.xlu0 %v801, 32
      %v1074 = vpop.permute.xlu0 %1073
      %1075 = vrot.lane.b32.xlu0 %v804, 32
      %v1076 = vpop.permute.xlu0 %1075
      %1077 = vrot.lane.b32.xlu0 %v807, 32
      %v1078 = vpop.permute.xlu0 %1077
      %1079 = vrot.lane.b32.xlu0 %v810, 32
      %v1080 = vpop.permute.xlu0 %1079
      %1081 = vrot.lane.b32.xlu0 %v813, 32
      %v1082 = vpop.permute.xlu0 %1081
      %1083 = vrot.lane.b32.xlu0 %v816, 32
      %v1084 = vpop.permute.xlu0 %1083
      %1085 = vrot.lane.b32.xlu0 %v819, 32
      %v1086 = vpop.permute.xlu0 %1085
      %1087 = vrot.lane.b32.xlu0 %v822, 32
      %v1088 = vpop.permute.xlu0 %1087
      %1089 = vrot.lane.b32.xlu0 %v941, 32
      %v1090 = vpop.permute.xlu0 %1089
      %1091 = vrot.lane.b32.xlu0 %v1060, 32
      %v1092 = vpop.permute.xlu0 %1091
      %vm1093 = vcmask 31744
      %v1095 = vsel %vm1093, %v485, %v743
      %v1097 = vsel %vm1093, %v486, %v745
      %v1099 = vsel %vm1093, %v487, %v747
      %v1101 = vsel %vm1093, %v488, %v749
      %v1103 = vsel %vm1093, %v489, %v751
      %v1105 = vsel %vm1093, %v490, %v753
      %v1107 = vsel %vm1093, %v491, %v755
      %v1109 = vsel %vm1093, %v492, %v757
      %v1111 = vsel %vm1093, %v493, %v759
      %v1113 = vsel %vm1093, %v494, %v761
      %v1115 = vsel %vm1093, %v495, %v763
      %v1117 = vsel %vm1093, %v496, %v765
      %v1119 = vsel %vm1093, %v497, %v767
      %v1121 = vsel %vm1093, %v498, %v769
      %v1123 = vsel %vm1093, %v499, %v771
      %v1125 = vsel %vm1093, %v500, %v773
      %vm1126 = vcmask 64512
      %v1128 = vsel %vm1126, %v1095, %v824
      %v1130 = vsel %vm1126, %v1097, %v826
      %v1132 = vsel %vm1126, %v1099, %v828
      %v1134 = vsel %vm1126, %v1101, %v830
      %v1136 = vsel %vm1126, %v1103, %v832
      %v1138 = vsel %vm1126, %v1105, %v834
      %v1140 = vsel %vm1126, %v1107, %v836
      %v1142 = vsel %vm1126, %v1109, %v838
      %v1144 = vsel %vm1126, %v1111, %v840
      %v1146 = vsel %vm1126, %v1113, %v842
      %v1148 = vsel %vm1126, %v1115, %v844
      %v1150 = vsel %vm1126, %v1117, %v846
      %v1152 = vsel %vm1126, %v1119, %v848
      %v1154 = vsel %vm1126, %v1121, %v850
      %v1156 = vsel %vm1126, %v1123, %v852
      %v1158 = vsel %vm1126, %v1125, %v854
      %vm1159 = vcmask 97280
      %v1161 = vsel %vm1159, %v1128, %v861
      %v1163 = vsel %vm1159, %v1130, %v863
      %v1165 = vsel %vm1159, %v1132, %v865
      %v1167 = vsel %vm1159, %v1134, %v867
      %v1169 = vsel %vm1159, %v1136, %v869
      %v1171 = vsel %vm1159, %v1138, %v871
      %v1173 = vsel %vm1159, %v1140, %v873
      %v1175 = vsel %vm1159, %v1142, %v875
      %v1177 = vsel %vm1159, %v1144, %v877
      %v1179 = vsel %vm1159, %v1146, %v879
      %v1181 = vsel %vm1159, %v1148, %v881
      %v1183 = vsel %vm1159, %v1150, %v883
      %v1185 = vsel %vm1159, %v1152, %v885
      %v1187 = vsel %vm1159, %v1154, %v887
      %v1189 = vsel %vm1159, %v1156, %v889
      %v1191 = vsel %vm1159, %v1158, %v891
      %vm1192 = vcmask 130048
      %v1194 = vsel %vm1192, %v1161, %v908
      %v1196 = vsel %vm1192, %v1163, %v910
      %v1198 = vsel %vm1192, %v1165, %v912
      %v1200 = vsel %vm1192, %v1167, %v914
      %v1202 = vsel %vm1192, %v1169, %v916
      %v1204 = vsel %vm1192, %v1171, %v918
      %v1206 = vsel %vm1192, %v1173, %v920
      %v1208 = vsel %vm1192, %v1175, %v922
      %v1210 = vsel %vm1192, %v1177, %v924
      %v1212 = vsel %vm1192, %v1179, %v926
      %v1214 = vsel %vm1192, %v1181, %v928
      %v1216 = vsel %vm1192, %v1183, %v930
      %v1218 = vsel %vm1192, %v1185, %v932
      %v1220 = vsel %vm1192, %v1187, %v934
      %v1222 = vsel %vm1192, %v1189, %v936
      %v1224 = vsel %vm1192, %v1191, %v938
      %vm1225 = vcmask 162816
      %v1227 = vsel %vm1225, %v1194, %v943
      %v1229 = vsel %vm1225, %v1196, %v945
      %v1231 = vsel %vm1225, %v1198, %v947
      %v1233 = vsel %vm1225, %v1200, %v949
      %v1235 = vsel %vm1225, %v1202, %v951
      %v1237 = vsel %vm1225, %v1204, %v953
      %v1239 = vsel %vm1225, %v1206, %v955
      %v1241 = vsel %vm1225, %v1208, %v957
      %v1243 = vsel %vm1225, %v1210, %v959
      %v1245 = vsel %vm1225, %v1212, %v961
      %v1247 = vsel %vm1225, %v1214, %v963
      %v1249 = vsel %vm1225, %v1216, %v965
      %v1251 = vsel %vm1225, %v1218, %v967
      %v1253 = vsel %vm1225, %v1220, %v969
      %v1255 = vsel %vm1225, %v1222, %v971
      %v1257 = vsel %vm1225, %v1224, %v973
      %vm1258 = vcmask 195584
      %v1260 = vsel %vm1258, %v1227, %v980
      %v1262 = vsel %vm1258, %v1229, %v982
      %v1264 = vsel %vm1258, %v1231, %v984
      %v1266 = vsel %vm1258, %v1233, %v986
      %v1268 = vsel %vm1258, %v1235, %v988
      %v1270 = vsel %vm1258, %v1237, %v990
      %v1272 = vsel %vm1258, %v1239, %v992
      %v1274 = vsel %vm1258, %v1241, %v994
      %v1276 = vsel %vm1258, %v1243, %v996
      %v1278 = vsel %vm1258, %v1245, %v998
      %v1280 = vsel %vm1258, %v1247, %v1000
      %v1282 = vsel %vm1258, %v1249, %v1002
      %v1284 = vsel %vm1258, %v1251, %v1004
      %v1286 = vsel %vm1258, %v1253, %v1006
      %v1288 = vsel %vm1258, %v1255, %v1008
      %v1290 = vsel %vm1258, %v1257, %v1010
      %vm1291 = vcmask 228352
      %v1293 = vsel %vm1291, %v1260, %v1027
      %v1295 = vsel %vm1291, %v1262, %v1029
      %v1297 = vsel %vm1291, %v1264, %v1031
      %v1299 = vsel %vm1291, %v1266, %v1033
      %v1301 = vsel %vm1291, %v1268, %v1035
      %v1303 = vsel %vm1291, %v1270, %v1037
      %v1305 = vsel %vm1291, %v1272, %v1039
      %v1307 = vsel %vm1291, %v1274, %v1041
      %v1309 = vsel %vm1291, %v1276, %v1043
      %v1311 = vsel %vm1291, %v1278, %v1045
      %v1313 = vsel %vm1291, %v1280, %v1047
      %v1315 = vsel %vm1291, %v1282, %v1049
      %v1317 = vsel %vm1291, %v1284, %v1051
      %v1319 = vsel %vm1291, %v1286, %v1053
      %v1321 = vsel %vm1291, %v1288, %v1055
      %v1323 = vsel %vm1291, %v1290, %v1057
      %vm1324 = vcmask 261120
      %v1326 = vsel %vm1324, %v1293, %v1062
      %v1328 = vsel %vm1324, %v1295, %v1064
      %v1330 = vsel %vm1324, %v1297, %v1066
      %v1332 = vsel %vm1324, %v1299, %v1068
      %v1334 = vsel %vm1324, %v1301, %v1070
      %v1336 = vsel %vm1324, %v1303, %v1072
      %v1338 = vsel %vm1324, %v1305, %v1074
      %v1340 = vsel %vm1324, %v1307, %v1076
      %v1342 = vsel %vm1324, %v1309, %v1078
      %v1344 = vsel %vm1324, %v1311, %v1080
      %v1346 = vsel %vm1324, %v1313, %v1082
      %v1348 = vsel %vm1324, %v1315, %v1084
      %v1350 = vsel %vm1324, %v1317, %v1086
      %v1352 = vsel %vm1324, %v1319, %v1088
      %v1354 = vsel %vm1324, %v1321, %v1090
      %v1356 = vsel %vm1324, %v1323, %v1092
      %v1357 = vld [vmem:[%s348] sm:$0xf]
      %v1358 = vld [vmem:[%s348 + $0x4] sm:$0xf]
      %v1359 = vld [vmem:[%s348 + $0x8] sm:$0xf]
      %v1360 = vld [vmem:[%s348 + $0xc] sm:$0xf]
      %v1361 = vld [vmem:[%s348 + $0x10] sm:$0x3]
      %v1362 = vld [vmem:[%s351] sm:$0x1]
      %v1364 = vlaneseq
      %v1365 = vshrl.u32 %v1364, 7
      %v1366 = vsub.s32 0, %v1365
      %v1367 = vrot.slane %v1362, %v1366
      %v1374 = vunpack.c.l.b16 %v1357
      %v1375 = vunpack.c.l.b16 %v1358
      %v1376 = vunpack.c.l.b16 %v1359
      %v1377 = vunpack.c.l.b16 %v1360
      %v1378 = vunpack.c.l.b16 %v1361
      %v1379 = vpack.c.b16 %v1375, %v1374
      %v1380 = vpack.c.b16 %v1377, %v1376
      %v1381 = vpack.c.b16 %v1378, %v1378
      %vm1384 = vcmask 293888
      %v1385 = vsel %vm1384, %v1326, 0
      %v1387 = vsel %vm1384, %v1328, 0
      %v1389 = vsel %vm1384, %v1330, 0
      %v1391 = vsel %vm1384, %v1332, 0
      %v1393 = vsel %vm1384, %v1334, 0
      %v1395 = vsel %vm1384, %v1336, 0
      %v1397 = vsel %vm1384, %v1338, 0
      %v1399 = vsel %vm1384, %v1340, 0
      %v1401 = vsel %vm1384, %v1342, 0
      %v1403 = vsel %vm1384, %v1344, 0
      %v1405 = vsel %vm1384, %v1346, 0
      %v1407 = vsel %vm1384, %v1348, 0
      %v1409 = vsel %vm1384, %v1350, 0
      %v1411 = vsel %vm1384, %v1352, 0
      %v1413 = vsel %vm1384, %v1354, 0
      %v1415 = vsel %vm1384, %v1356, 0
      %vm1417 = vcmask 1041408
      %v1419 = vsel %vm1417, %v1381, 0
      %1421 = vmatprep.subr.bf16.mxu0 0
      %1422 = vmatpush1.bf16.msra.mxu0 %v1379
      %1423 = vmatprep.subr.bf16.mxu0 0
      %1424 = vmatpush1.bf16.msra.mxu0 %v1380
      %1425 = vmatprep.subr.bf16.mxu0 0
      %1426 = vmatpush1.bf16.msra.mxu0 %v1419
      %1427 = vmatprep.subr.bf16.mxu0 0
      %1428 = vmatpush1.bf16.msra.mxu0 0
      %1429 = vmatprep.subr.bf16.mxu0 0
      %1430 = vmatpush1.bf16.msra.mxu0 0
      %1431 = vmatprep.subr.bf16.mxu0 0
      %1432 = vmatpush1.bf16.msra.mxu0 0
      %1433 = vmatprep.subr.bf16.mxu0 0
      %1434 = vmatpush1.bf16.msra.mxu0 0
      %1435 = vmatprep.subr.bf16.mxu0 0
      %1436 = vmatpush1.bf16.msra.mxu0 0
      %1437 = vmatprep.subr.bf16.mxu0 0
      %1438 = vmatpush1.bf16.msra.mxu0 0
      %1439 = vmatprep.subr.bf16.mxu0 0
      %1440 = vmatpush1.bf16.msra.mxu0 0
      %1441 = vmatprep.subr.bf16.mxu0 0
      %1442 = vmatpush1.bf16.msra.mxu0 0
      %1443 = vmatprep.subr.bf16.mxu0 0
      %1444 = vmatpush1.bf16.msra.mxu0 0
      %1445 = vmatprep.subr.bf16.mxu0 0
      %1446 = vmatpush1.bf16.msra.mxu0 0
      %1447 = vmatprep.subr.bf16.mxu0 0
      %1448 = vmatpush1.bf16.msra.mxu0 0
      %1449 = vmatprep.subr.bf16.mxu0 0
      %1450 = vmatpush1.bf16.msra.mxu0 0
      %1451 = vmatprep.subr.bf16.mxu0 0
      %1452 = vmatpush1.bf16.msra.mxu0 0
      %1453 = vmatprep.mubr.bf16.mxu0 0
      %1454 = vmatmul.mubr.bf16.gmra.mrb[0].mxu0 %v1385
      %v1455 = vpop.f32.mrb[0].mxu0
      %v1456 = vadd.f32 %v1367, %v1455
      %v1457 = vpop.f32.mrb[0].mxu0
      %v1458 = vpop.f32.mrb[0].mxu0
      %v1459 = vadd.f32 %v1367, %v1458
      %v1460 = vpop.f32.mrb[0].mxu0
      %1461 = vmatprep.mubr.bf16.mxu0 0
      %1462 = vmatmul.mubr.bf16.gmra.mrb[0].mxu0 %v1387
      %v1463 = vpop.f32.mrb[0].mxu0
      %v1464 = vadd.f32 %v1367, %v1463
      %v1465 = vpop.f32.mrb[0].mxu0
      %v1466 = vpop.f32.mrb[0].mxu0
      %v1467 = vadd.f32 %v1367, %v1466
      %v1468 = vpop.f32.mrb[0].mxu0
      %1469 = vmatprep.mubr.bf16.mxu0 0
      %1470 = vmatmul.mubr.bf16.gmra.mrb[0].mxu0 %v1389
      %v1471 = vpop.f32.mrb[0].mxu0
      %v1472 = vadd.f32 %v1367, %v1471
      %v1473 = vpop.f32.mrb[0].mxu0
      %v1474 = vpop.f32.mrb[0].mxu0
      %v1475 = vadd.f32 %v1367, %v1474
      %v1476 = vpop.f32.mrb[0].mxu0
      %1477 = vmatprep.mubr.bf16.mxu0 0
      %1478 = vmatmul.mubr.bf16.gmra.mrb[0].mxu0 %v1391
      %v1479 = vpop.f32.mrb[0].mxu0
      %v1480 = vadd.f32 %v1367, %v1479
      %v1481 = vpop.f32.mrb[0].mxu0
      %v1482 = vpop.f32.mrb[0].mxu0
      %v1483 = vadd.f32 %v1367, %v1482
      %v1484 = vpop.f32.mrb[0].mxu0
      %1485 = vmatprep.mubr.bf16.mxu0 0
      %1486 = vmatmul.mubr.bf16.gmra.mrb[0].mxu0 %v1393
      %v1487 = vpop.f32.mrb[0].mxu0
      %v1488 = vadd.f32 %v1367, %v1487
      %v1489 = vpop.f32.mrb[0].mxu0
      %v1490 = vpop.f32.mrb[0].mxu0
      %v1491 = vadd.f32 %v1367, %v1490
      %v1492 = vpop.f32.mrb[0].mxu0
      %1493 = vmatprep.mubr.bf16.mxu0 0
      %1494 = vmatmul.mubr.bf16.gmra.mrb[0].mxu0 %v1395
      %v1495 = vpop.f32.mrb[0].mxu0
      %v1496 = vadd.f32 %v1367, %v1495
      %v1497 = vpop.f32.mrb[0].mxu0
      %v1498 = vpop.f32.mrb[0].mxu0
      %v1499 = vadd.f32 %v1367, %v1498
      %v1500 = vpop.f32.mrb[0].mxu0
      %1501 = vmatprep.mubr.bf16.mxu0 0
      %1502 = vmatmul.mubr.bf16.gmra.mrb[0].mxu0 %v1397
      %v1503 = vpop.f32.mrb[0].mxu0
      %v1504 = vadd.f32 %v1367, %v1503
      %v1505 = vpop.f32.mrb[0].mxu0
      %v1506 = vpop.f32.mrb[0].mxu0
      %v1507 = vadd.f32 %v1367, %v1506
      %v1508 = vpop.f32.mrb[0].mxu0
      %1509 = vmatprep.mubr.bf16.mxu0 0
      %1510 = vmatmul.mubr.bf16.gmra.mrb[0].mxu0 %v1399
      %v1511 = vpop.f32.mrb[0].mxu0
      %v1512 = vadd.f32 %v1367, %v1511
      %v1513 = vpop.f32.mrb[0].mxu0
      %v1514 = vpop.f32.mrb[0].mxu0
      %v1515 = vadd.f32 %v1367, %v1514
      %v1516 = vpop.f32.mrb[0].mxu0
      %1517 = vmatprep.mubr.bf16.mxu0 0
      %1518 = vmatmul.mubr.bf16.gmra.mrb[0].mxu0 %v1401
      %v1519 = vpop.f32.mrb[0].mxu0
      %v1520 = vadd.f32 %v1367, %v1519
      %v1521 = vpop.f32.mrb[0].mxu0
      %v1522 = vpop.f32.mrb[0].mxu0
      %v1523 = vadd.f32 %v1367, %v1522
      %v1524 = vpop.f32.mrb[0].mxu0
      %1525 = vmatprep.mubr.bf16.mxu0 0
      %1526 = vmatmul.mubr.bf16.gmra.mrb[0].mxu0 %v1403
      %v1527 = vpop.f32.mrb[0].mxu0
      %v1528 = vadd.f32 %v1367, %v1527
      %v1529 = vpop.f32.mrb[0].mxu0
      %v1530 = vpop.f32.mrb[0].mxu0
      %v1531 = vadd.f32 %v1367, %v1530
      %v1532 = vpop.f32.mrb[0].mxu0
      %1533 = vmatprep.mubr.bf16.mxu0 0
      %1534 = vmatmul.mubr.bf16.gmra.mrb[0].mxu0 %v1405
      %v1535 = vpop.f32.mrb[0].mxu0
      %v1536 = vadd.f32 %v1367, %v1535
      %v1537 = vpop.f32.mrb[0].mxu0
      %v1538 = vpop.f32.mrb[0].mxu0
      %v1539 = vadd.f32 %v1367, %v1538
      %v1540 = vpop.f32.mrb[0].mxu0
      %1541 = vmatprep.mubr.bf16.mxu0 0
      %1542 = vmatmul.mubr.bf16.gmra.mrb[0].mxu0 %v1407
      %v1543 = vpop.f32.mrb[0].mxu0
      %v1544 = vadd.f32 %v1367, %v1543
      %v1545 = vpop.f32.mrb[0].mxu0
      %v1546 = vpop.f32.mrb[0].mxu0
      %v1547 = vadd.f32 %v1367, %v1546
      %v1548 = vpop.f32.mrb[0].mxu0
      %1549 = vmatprep.mubr.bf16.mxu0 0
      %1550 = vmatmul.mubr.bf16.gmra.mrb[0].mxu0 %v1409
      %v1551 = vpop.f32.mrb[0].mxu0
      %v1552 = vadd.f32 %v1367, %v1551
      %v1553 = vpop.f32.mrb[0].mxu0
      %v1554 = vpop.f32.mrb[0].mxu0
      %v1555 = vadd.f32 %v1367, %v1554
      %v1556 = vpop.f32.mrb[0].mxu0
      %1557 = vmatprep.mubr.bf16.mxu0 0
      %1558 = vmatmul.mubr.bf16.gmra.mrb[0].mxu0 %v1411
      %v1559 = vpop.f32.mrb[0].mxu0
      %v1560 = vadd.f32 %v1367, %v1559
      %v1561 = vpop.f32.mrb[0].mxu0
      %v1562 = vpop.f32.mrb[0].mxu0
      %v1563 = vadd.f32 %v1367, %v1562
      %v1564 = vpop.f32.mrb[0].mxu0
      %1565 = vmatprep.mubr.bf16.mxu0 0
      %1566 = vmatmul.mubr.bf16.gmra.mrb[0].mxu0 %v1413
      %v1567 = vpop.f32.mrb[0].mxu0
      %v1568 = vadd.f32 %v1367, %v1567
      %v1569 = vpop.f32.mrb[0].mxu0
      %v1570 = vpop.f32.mrb[0].mxu0
      %v1571 = vadd.f32 %v1367, %v1570
      %v1572 = vpop.f32.mrb[0].mxu0
      %1573 = vmatprep.mubr.bf16.mxu0 0
      %1574 = vmatmul.mubr.bf16.gmra.mrb[0].mxu0 %v1415
      %v1575 = vpop.f32.mrb[0].mxu0
      %v1576 = vadd.f32 %v1367, %v1575
      %v1577 = vpop.f32.mrb[0].mxu0
      %v1578 = vpop.f32.mrb[0].mxu0
      %v1579 = vadd.f32 %v1367, %v1578
      %v1580 = vpop.f32.mrb[0].mxu0
      %1581 = vdwg.mxu0
      %v1582 = vxor.u32 %v1456, 2147483648
      %v1583 = vxor.u32 %v1459, 2147483648
      %v1584 = vxor.u32 %v1464, 2147483648
      %v1585 = vxor.u32 %v1467, 2147483648
      %v1586 = vxor.u32 %v1472, 2147483648
      %v1587 = vxor.u32 %v1475, 2147483648
      %v1588 = vxor.u32 %v1480, 2147483648
      %v1589 = vxor.u32 %v1483, 2147483648
      %v1590 = vxor.u32 %v1488, 2147483648
      %v1591 = vxor.u32 %v1491, 2147483648
      %v1592 = vxor.u32 %v1496, 2147483648
      %v1593 = vxor.u32 %v1499, 2147483648
      %v1594 = vxor.u32 %v1504, 2147483648
      %v1595 = vxor.u32 %v1507, 2147483648
      %v1596 = vxor.u32 %v1512, 2147483648
      %v1597 = vxor.u32 %v1515, 2147483648
      %v1598 = vxor.u32 %v1520, 2147483648
      %v1599 = vxor.u32 %v1523, 2147483648
      %v1600 = vxor.u32 %v1528, 2147483648
      %v1601 = vxor.u32 %v1531, 2147483648
      %v1602 = vxor.u32 %v1536, 2147483648
      %v1603 = vxor.u32 %v1539, 2147483648
      %v1604 = vxor.u32 %v1544, 2147483648
      %v1605 = vxor.u32 %v1547, 2147483648
      %v1606 = vxor.u32 %v1552, 2147483648
      %v1607 = vxor.u32 %v1555, 2147483648
      %v1608 = vxor.u32 %v1560, 2147483648
      %v1609 = vxor.u32 %v1563, 2147483648
      %v1610 = vxor.u32 %v1568, 2147483648
      %v1611 = vxor.u32 %v1571, 2147483648
      %v1612 = vxor.u32 %v1576, 2147483648
      %v1613 = vxor.u32 %v1579, 2147483648
      %v1614 = vmul.f32 %v1582, 1.442695
      %v1615 = vpow.pop %v1614
      %v1616 = vmul.f32 %v1583, 1.442695
      %v1617 = vpow.pop %v1616
      %v1618 = vmul.f32 %v1584, 1.442695
      %v1619 = vpow.pop %v1618
      %v1620 = vmul.f32 %v1585, 1.442695
      %v1621 = vpow.pop %v1620
      %v1622 = vmul.f32 %v1586, 1.442695
      %v1623 = vpow.pop %v1622
      %v1624 = vmul.f32 %v1587, 1.442695
      %v1625 = vpow.pop %v1624
      %v1626 = vmul.f32 %v1588, 1.442695
      %v1627 = vpow.pop %v1626
      %v1628 = vmul.f32 %v1589, 1.442695
      %v1629 = vpow.pop %v1628
      %v1630 = vmul.f32 %v1590, 1.442695
      %v1631 = vpow.pop %v1630
      %v1632 = vmul.f32 %v1591, 1.442695
      %v1633 = vpow.pop %v1632
      %v1634 = vmul.f32 %v1592, 1.442695
      %v1635 = vpow.pop %v1634
      %v1636 = vmul.f32 %v1593, 1.442695
      %v1637 = vpow.pop %v1636
      %v1638 = vmul.f32 %v1594, 1.442695
      %v1639 = vpow.pop %v1638
      %v1640 = vmul.f32 %v1595, 1.442695
      %v1641 = vpow.pop %v1640
      %v1642 = vmul.f32 %v1596, 1.442695
      %v1643 = vpow.pop %v1642
      %v1644 = vmul.f32 %v1597, 1.442695
      %v1645 = vpow.pop %v1644
      %v1646 = vmul.f32 %v1598, 1.442695
      %v1647 = vpow.pop %v1646
      %v1648 = vmul.f32 %v1599, 1.442695
      %v1649 = vpow.pop %v1648
      %v1650 = vmul.f32 %v1600, 1.442695
      %v1651 = vpow.pop %v1650
      %v1652 = vmul.f32 %v1601, 1.442695
      %v1653 = vpow.pop %v1652
      %v1654 = vmul.f32 %v1602, 1.442695
      %v1655 = vpow.pop %v1654
      %v1656 = vmul.f32 %v1603, 1.442695
      %v1657 = vpow.pop %v1656
      %v1658 = vmul.f32 %v1604, 1.442695
      %v1659 = vpow.pop %v1658
      %v1660 = vmul.f32 %v1605, 1.442695
      %v1661 = vpow.pop %v1660
      %v1662 = vmul.f32 %v1606, 1.442695
      %v1663 = vpow.pop %v1662
      %v1664 = vmul.f32 %v1607, 1.442695
      %v1665 = vpow.pop %v1664
      %v1666 = vmul.f32 %v1608, 1.442695
      %v1667 = vpow.pop %v1666
      %v1668 = vmul.f32 %v1609, 1.442695
      %v1669 = vpow.pop %v1668
      %v1670 = vmul.f32 %v1610, 1.442695
      %v1671 = vpow.pop %v1670
      %v1672 = vmul.f32 %v1611, 1.442695
      %v1673 = vpow.pop %v1672
      %v1674 = vmul.f32 %v1612, 1.442695
      %v1675 = vpow.pop %v1674
      %v1676 = vmul.f32 %v1613, 1.442695
      %v1677 = vpow.pop %v1676
      %v1678 = vadd.f32 %v1615, 1.0
      %v1679 = vadd.f32 %v1617, 1.0
      %v1680 = vadd.f32 %v1619, 1.0
      %v1681 = vadd.f32 %v1621, 1.0
      %v1682 = vadd.f32 %v1623, 1.0
      %v1683 = vadd.f32 %v1625, 1.0
      %v1684 = vadd.f32 %v1627, 1.0
      %v1685 = vadd.f32 %v1629, 1.0
      %v1686 = vadd.f32 %v1631, 1.0
      %v1687 = vadd.f32 %v1633, 1.0
      %v1688 = vadd.f32 %v1635, 1.0
      %v1689 = vadd.f32 %v1637, 1.0
      %v1690 = vadd.f32 %v1639, 1.0
      %v1691 = vadd.f32 %v1641, 1.0
      %v1692 = vadd.f32 %v1643, 1.0
      %v1693 = vadd.f32 %v1645, 1.0
      %v1694 = vadd.f32 %v1647, 1.0
      %v1695 = vadd.f32 %v1649, 1.0
      %v1696 = vadd.f32 %v1651, 1.0
      %v1697 = vadd.f32 %v1653, 1.0
      %v1698 = vadd.f32 %v1655, 1.0
      %v1699 = vadd.f32 %v1657, 1.0
      %v1700 = vadd.f32 %v1659, 1.0
      %v1701 = vadd.f32 %v1661, 1.0
      %v1702 = vadd.f32 %v1663, 1.0
      %v1703 = vadd.f32 %v1665, 1.0
      %v1704 = vadd.f32 %v1667, 1.0
      %v1705 = vadd.f32 %v1669, 1.0
      %v1706 = vadd.f32 %v1671, 1.0
      %v1707 = vadd.f32 %v1673, 1.0
      %v1708 = vadd.f32 %v1675, 1.0
      %v1709 = vadd.f32 %v1677, 1.0
      %v1710 = vrcp.pop %v1678
      %v1711 = vmul.f32 1.0, %v1710
      %v1712 = vrcp.pop %v1679
      %v1713 = vmul.f32 1.0, %v1712
      %v1714 = vrcp.pop %v1680
      %v1715 = vmul.f32 1.0, %v1714
      %v1716 = vrcp.pop %v1681
      %v1717 = vmul.f32 1.0, %v1716
      %v1718 = vrcp.pop %v1682
      %v1719 = vmul.f32 1.0, %v1718
      %v1720 = vrcp.pop %v1683
      %v1721 = vmul.f32 1.0, %v1720
      %v1722 = vrcp.pop %v1684
      %v1723 = vmul.f32 1.0, %v1722
      %v1724 = vrcp.pop %v1685
      %v1725 = vmul.f32 1.0, %v1724
      %v1726 = vrcp.pop %v1686
      %v1727 = vmul.f32 1.0, %v1726
      %v1728 = vrcp.pop %v1687
      %v1729 = vmul.f32 1.0, %v1728
      %v1730 = vrcp.pop %v1688
      %v1731 = vmul.f32 1.0, %v1730
      %v1732 = vrcp.pop %v1689
      %v1733 = vmul.f32 1.0, %v1732
      %v1734 = vrcp.pop %v1690
      %v1735 = vmul.f32 1.0, %v1734
      %v1736 = vrcp.pop %v1691
      %v1737 = vmul.f32 1.0, %v1736
      %v1738 = vrcp.pop %v1692
      %v1739 = vmul.f32 1.0, %v1738
      %v1740 = vrcp.pop %v1693
      %v1741 = vmul.f32 1.0, %v1740
      %v1742 = vrcp.pop %v1694
      %v1743 = vmul.f32 1.0, %v1742
      %v1744 = vrcp.pop %v1695
      %v1745 = vmul.f32 1.0, %v1744
      %v1746 = vrcp.pop %v1696
      %v1747 = vmul.f32 1.0, %v1746
      %v1748 = vrcp.pop %v1697
      %v1749 = vmul.f32 1.0, %v1748
      %v1750 = vrcp.pop %v1698
      %v1751 = vmul.f32 1.0, %v1750
      %v1752 = vrcp.pop %v1699
      %v1753 = vmul.f32 1.0, %v1752
      %v1754 = vrcp.pop %v1700
      %v1755 = vmul.f32 1.0, %v1754
      %v1756 = vrcp.pop %v1701
      %v1757 = vmul.f32 1.0, %v1756
      %v1758 = vrcp.pop %v1702
      %v1759 = vmul.f32 1.0, %v1758
      %v1760 = vrcp.pop %v1703
      %v1761 = vmul.f32 1.0, %v1760
      %v1762 = vrcp.pop %v1704
      %v1763 = vmul.f32 1.0, %v1762
      %v1764 = vrcp.pop %v1705
      %v1765 = vmul.f32 1.0, %v1764
      %v1766 = vrcp.pop %v1706
      %v1767 = vmul.f32 1.0, %v1766
      %v1768 = vrcp.pop %v1707
      %v1769 = vmul.f32 1.0, %v1768
      %v1770 = vrcp.pop %v1708
      %v1771 = vmul.f32 1.0, %v1770
      %v1772 = vrcp.pop %v1709
      %v1773 = vmul.f32 1.0, %v1772
      %v1774 = vmul.f32 %v1456, %v1711
      %v1775 = vmul.f32 %v1459, %v1713
      %v1776 = vmul.f32 %v1464, %v1715
      %v1777 = vmul.f32 %v1467, %v1717
      %v1778 = vmul.f32 %v1472, %v1719
      %v1779 = vmul.f32 %v1475, %v1721
      %v1780 = vmul.f32 %v1480, %v1723
      %v1781 = vmul.f32 %v1483, %v1725
      %v1782 = vmul.f32 %v1488, %v1727
      %v1783 = vmul.f32 %v1491, %v1729
      %v1784 = vmul.f32 %v1496, %v1731
      %v1785 = vmul.f32 %v1499, %v1733
      %v1786 = vmul.f32 %v1504, %v1735
      %v1787 = vmul.f32 %v1507, %v1737
      %v1788 = vmul.f32 %v1512, %v1739
      %v1789 = vmul.f32 %v1515, %v1741
      %v1790 = vmul.f32 %v1520, %v1743
      %v1791 = vmul.f32 %v1523, %v1745
      %v1792 = vmul.f32 %v1528, %v1747
      %v1793 = vmul.f32 %v1531, %v1749
      %v1794 = vmul.f32 %v1536, %v1751
      %v1795 = vmul.f32 %v1539, %v1753
      %v1796 = vmul.f32 %v1544, %v1755
      %v1797 = vmul.f32 %v1547, %v1757
      %v1798 = vmul.f32 %v1552, %v1759
      %v1799 = vmul.f32 %v1555, %v1761
      %v1800 = vmul.f32 %v1560, %v1763
      %v1801 = vmul.f32 %v1563, %v1765
      %v1802 = vmul.f32 %v1568, %v1767
      %v1803 = vmul.f32 %v1571, %v1769
      %v1804 = vmul.f32 %v1576, %v1771
      %v1805 = vmul.f32 %v1579, %v1773
      %v1806 = vpack.c.bf16 %v1775, %v1774
      %v1807 = vpack.c.bf16 %v1777, %v1776
      %v1808 = vpack.c.bf16 %v1779, %v1778
      %v1809 = vpack.c.bf16 %v1781, %v1780
      %v1810 = vpack.c.bf16 %v1783, %v1782
      %v1811 = vpack.c.bf16 %v1785, %v1784
      %v1812 = vpack.c.bf16 %v1787, %v1786
      %v1813 = vpack.c.bf16 %v1789, %v1788
      %v1814 = vpack.c.bf16 %v1791, %v1790
      %v1815 = vpack.c.bf16 %v1793, %v1792
      %v1816 = vpack.c.bf16 %v1795, %v1794
      %v1817 = vpack.c.bf16 %v1797, %v1796
      %v1818 = vpack.c.bf16 %v1799, %v1798
      %v1819 = vpack.c.bf16 %v1801, %v1800
      %v1820 = vpack.c.bf16 %v1803, %v1802
      %v1821 = vpack.c.bf16 %v1805, %v1804
      %v1838 = vunpack.c.l.b16 %v1806
      %v1839 = vunpack.c.h.b16 %v1806
      %v1840 = vunpack.c.l.b16 %v1807
      %v1841 = vunpack.c.h.b16 %v1807
      %v1842 = vunpack.c.l.b16 %v1808
      %v1843 = vunpack.c.h.b16 %v1808
      %v1844 = vunpack.c.l.b16 %v1809
      %v1845 = vunpack.c.h.b16 %v1809
      %v1846 = vunpack.c.l.b16 %v1810
      %v1847 = vunpack.c.h.b16 %v1810
      %v1848 = vunpack.c.l.b16 %v1811
      %v1849 = vunpack.c.h.b16 %v1811
      %v1850 = vunpack.c.l.b16 %v1812
      %v1851 = vunpack.c.h.b16 %v1812
      %v1852 = vunpack.c.l.b16 %v1813
      %v1853 = vunpack.c.h.b16 %v1813
      %v1854 = vunpack.c.l.b16 %v1814
      %v1855 = vunpack.c.h.b16 %v1814
      %v1856 = vunpack.c.l.b16 %v1815
      %v1857 = vunpack.c.h.b16 %v1815
      %v1858 = vunpack.c.l.b16 %v1816
      %v1859 = vunpack.c.h.b16 %v1816
      %v1860 = vunpack.c.l.b16 %v1817
      %v1861 = vunpack.c.h.b16 %v1817
      %v1862 = vunpack.c.l.b16 %v1818
      %v1863 = vunpack.c.h.b16 %v1818
      %v1864 = vunpack.c.l.b16 %v1819
      %v1865 = vunpack.c.h.b16 %v1819
      %v1866 = vunpack.c.l.b16 %v1820
      %v1867 = vunpack.c.h.b16 %v1820
      %v1868 = vunpack.c.l.b16 %v1821
      %v1869 = vunpack.c.h.b16 %v1821
      %v1870 = vpack.c.b16 %v1838, %v1838
      %v1871 = vpack.c.b16 %v1839, %v1839
      %v1872 = vpack.c.b16 %v1840, %v1840
      %v1873 = vpack.c.b16 %v1841, %v1841
      %v1874 = vpack.c.b16 %v1842, %v1842
      %v1875 = vpack.c.b16 %v1843, %v1843
      %v1876 = vpack.c.b16 %v1844, %v1844
      %v1877 = vpack.c.b16 %v1845, %v1845
      %v1878 = vpack.c.b16 %v1846, %v1846
      %v1879 = vpack.c.b16 %v1847, %v1847
      %v1880 = vpack.c.b16 %v1848, %v1848
      %v1881 = vpack.c.b16 %v1849, %v1849
      %v1882 = vpack.c.b16 %v1850, %v1850
      %v1883 = vpack.c.b16 %v1851, %v1851
      %v1884 = vpack.c.b16 %v1852, %v1852
      %v1885 = vpack.c.b16 %v1853, %v1853
      %v1886 = vpack.c.b16 %v1854, %v1854
      %v1887 = vpack.c.b16 %v1855, %v1855
      %v1888 = vpack.c.b16 %v1856, %v1856
      %v1889 = vpack.c.b16 %v1857, %v1857
      %v1890 = vpack.c.b16 %v1858, %v1858
      %v1891 = vpack.c.b16 %v1859, %v1859
      %v1892 = vpack.c.b16 %v1860, %v1860
      %v1893 = vpack.c.b16 %v1861, %v1861
      %v1894 = vpack.c.b16 %v1862, %v1862
      %v1895 = vpack.c.b16 %v1863, %v1863
      %v1896 = vpack.c.b16 %v1864, %v1864
      %v1897 = vpack.c.b16 %v1865, %v1865
      %v1898 = vpack.c.b16 %v1866, %v1866
      %v1899 = vpack.c.b16 %v1867, %v1867
      %v1900 = vpack.c.b16 %v1868, %v1868
      %v1901 = vpack.c.b16 %v1869, %v1869
      %1934 = vst [vmem:[%s364] sm:$0xf] %v1870
      %1935 = vst [vmem:[%s364 + $0x4] sm:$0xf] %v1871
      %1936 = vst [vmem:[%s364 + $0x8] sm:$0xf] %v1872
      %1937 = vst [vmem:[%s364 + $0xc] sm:$0xf] %v1873
      %1938 = vst [vmem:[%s364 + $0x10] sm:$0xf] %v1874
      %1939 = vst [vmem:[%s364 + $0x14] sm:$0xf] %v1875
      %1940 = vst [vmem:[%s364 + $0x18] sm:$0xf] %v1876
      %1941 = vst [vmem:[%s364 + $0x1c] sm:$0xf] %v1877
      %1942 = vst [vmem:[%s364 + $0x20] sm:$0xf] %v1878
      %1943 = vst [vmem:[%s364 + $0x24] sm:$0xf] %v1879
      %1944 = vst [vmem:[%s364 + $0x28] sm:$0xf] %v1880
      %1945 = vst [vmem:[%s364 + $0x2c] sm:$0xf] %v1881
      %1946 = vst [vmem:[%s364 + $0x30] sm:$0xf] %v1882
      %1947 = vst [vmem:[%s364 + $0x34] sm:$0xf] %v1883
      %1948 = vst [vmem:[%s364 + $0x38] sm:$0xf] %v1884
      %1949 = vst [vmem:[%s364 + $0x3c] sm:$0xf] %v1885
      %1950 = vst [vmem:[%s364 + $0x40] sm:$0xf] %v1886
      %1951 = vst [vmem:[%s364 + $0x44] sm:$0xf] %v1887
      %1952 = vst [vmem:[%s364 + $0x48] sm:$0xf] %v1888
      %1953 = vst [vmem:[%s364 + $0x4c] sm:$0xf] %v1889
      %1954 = vst [vmem:[%s364 + $0x50] sm:$0xf] %v1890
      %1955 = vst [vmem:[%s364 + $0x54] sm:$0xf] %v1891
      %1956 = vst [vmem:[%s364 + $0x58] sm:$0xf] %v1892
      %1957 = vst [vmem:[%s364 + $0x5c] sm:$0xf] %v1893
      %1958 = vst [vmem:[%s364 + $0x60] sm:$0xf] %v1894
      %1959 = vst [vmem:[%s364 + $0x64] sm:$0xf] %v1895
      %1960 = vst [vmem:[%s364 + $0x68] sm:$0xf] %v1896
      %1961 = vst [vmem:[%s364 + $0x6c] sm:$0xf] %v1897
      %1962 = vst [vmem:[%s364 + $0x70] sm:$0xf] %v1898
      %1963 = vst [vmem:[%s364 + $0x74] sm:$0xf] %v1899
      %1964 = vst [vmem:[%s364 + $0x78] sm:$0xf] %v1900
      %1965 = vst [vmem:[%s364 + $0x7c] sm:$0xf] %v1901
      %s1966 = smul.u32 16, %s22
      %p1967 = scmp.lt.s32.totalorder %s21, 1
      %s1968 = scalar_select %p1967, %s21, 1
      %p1969 = scmp.lt.s32.totalorder %s1966, 15
      %s1970 = scalar_select %p1969, %s1966, 15
      %p1971 = scmp.lt.s32.totalorder %s20, 0
      %s1972 = scalar_select %p1971, %s20, 0
      %s1973 = smul.addr %s1970, 2
      %s1974 = sadd.s32 %s1972, %s1973
      %s1975 = smul.addr %s1968, 32
      %s1976 = sadd.s32 %s1974, %s1975
      %s1977 = smul.addr %s1976, 4
      %s1978 = scalar_lea.vmem %s4, %s1977
      // Predicated region
      $region37: #{repconv_forward.1} parent=35 // pred_check
        %p1979 = pneg %p168
      $region38: #{repconv_forward.1} parent=35 // pred_check_branch
        %1981 = sbr.rel (%p1979) target = $region40
      $region39: #{repconv_forward.1} parent=35 // pred_region
        %s1982 = smul.u32 16, %s22
      $region40: #{repconv_forward.1} parent=35 // pred_fallthru
        _
    $region36: #{repconv_forward.1} parent=5 // pred_fallthru
      _
    %p1983 = scmp.le.s32.totalorder 2, %s10
    // Predicated region
    $region41: #{repconv_forward.1} parent=5 // pred_check
      %p1984 = pneg %p1983
    $region42: #{repconv_forward.1} parent=5 // pred_check_branch
      %1986 = sbr.rel (%p1984) target = $region44
    $region43: #{repconv_forward.1} parent=5 // pred_region
      %s1987 = ssub.s32 %s10, 2
      // Predicated region
      $region45: #{repconv_forward.1} parent=43 // pred_check
        %p1988 = pneg %p174
      $region46: #{repconv_forward.1} parent=43 // pred_check_branch
        %1990 = sbr.rel (%p1988) target = $region48
      $region47: #{repconv_forward.1} parent=43 // pred_region
        %s1991 = smul.u32 16, %s25
        %p1992 = scmp.lt.s32.totalorder %s24, 1
        %s1993 = scalar_select %p1992, %s24, 1
        %p1994 = scmp.lt.s32.totalorder %s1991, 15
        %s1995 = scalar_select %p1994, %s1991, 15
        %p1996 = scmp.lt.s32.totalorder %s23, 0
        %s1997 = scalar_select %p1996, %s23, 0
        %s1998 = smul.addr %s1995, 2
        %s1999 = sadd.s32 %s1997, %s1998
        %s2000 = smul.addr %s1993, 32
        %s2001 = sadd.s32 %s1999, %s2000
        %s2002 = smul.addr %s2001, 4
        %s2003 = scalar_lea.vmem %s4, %s2002
      $region48: #{repconv_forward.1} parent=43 // pred_fallthru
        _
    $region44: #{repconv_forward.1} parent=5 // pred_fallthru
      _
  $region6: #{repconv_forward.1} parent=0 // loop_footer
    %s14 = sadd.s32 1, %s10
  $region7: #{repconv_forward.1} parent=0 // loop_footer_branch
    %9 = sbr.rel target = $region3
  $region8: #{repconv_forward.1} parent=0 // loop_exit
    _

</llo_original>
